<compile_context>
chip_gen: v6e
topology: v6e:2x2x1
jax: 0.10.0
libtpu: 0.0.40
codegen_flags: <defaults>
</compile_context>

<pallas_src>
import jax
import jax.numpy as jnp
from jax.experimental import pallas as pl
from jax.experimental.pallas import tpu as pltpu


def gnn_kernel(S_ref, H1_ref, b1_ref, H2T_ref, b2_ref, out_ref):
    """Processes a block of BB graphs per grid step.

    S_ref   : (BB, n, n)  graph shift operators (storage dtype: f32 or bf16)
    H1_ref  : (K, F1)     layer-1 filter taps (input feature dim is 1), f32
    b1_ref  : (1, F1)     layer-1 bias, f32
    H2T_ref : (K, F1)     layer-2 filter taps transposed (output dim 1), f32
    b2_ref  : (1, 1)      layer-2 bias scalar, f32, in SMEM
    out_ref : (BB, n)     |p| for this block (lane-dense, no trailing 1-dim)
    """
    S = S_ref[...]                                   # native storage dtype
    BB, n, _ = S_ref.shape
    K, F1 = H1_ref.shape

    # ---------------- layer 1 (input node features are all-ones) -----------
    d = jnp.ones((BB, n), jnp.float32)               # S^0 · 1
    y1 = jnp.zeros((BB, n, F1), jnp.float32)
    for k in range(K):                               # static, small K
        if k > 0:
            # matvec S^k·1 via broadcast-mul + lane reduction (VPU/XLU),
            # f32 accumulation; cast of S is fused per use (no persistent copy)
            d = jnp.sum(S.astype(jnp.float32) * d[:, None, :], axis=-1)
        h1k = H1_ref[k:k + 1, :]                     # (1, F1)
        y1 = y1 + d[:, :, None] * h1k[None, :, :]    # (BB, n, F1)
    z1 = jnp.maximum(y1 + b1_ref[...][None, :, :], 0.0)   # ReLU

    # ---------------- layer 2 (F1 -> 1) ------------------------------------
    diff2 = z1                                       # (BB, n, F1) f32
    acc2 = jnp.zeros((BB, n, F1), jnp.float32)
    for k in range(K):
        if k > 0:
            # real MXU work: batched (n,n) @ (n,F1) diffusion, f32 accumulate
            diff2 = jnp.einsum(
                "bij,bjf->bif", S, diff2.astype(S.dtype),
                preferred_element_type=jnp.float32)  # (BB, n, F1)
        h2k = H2T_ref[k:k + 1, :]                    # (1, F1)
        acc2 = acc2 + diff2 * h2k[None, :, :]        # weighted taps, no reduce
    y2 = jnp.sum(acc2, axis=-1)                      # single lane reduction

    out_ref[...] = jnp.abs(y2 + b2_ref[0, 0]).astype(out_ref.dtype)


def _pick_block_b(block_b, B, n, F1, itemsize):
    """Largest BB <= block_b whose working set fits a conservative VMEM budget."""
    vmem_budget = 24 * 1024 * 1024                   # headroom under 32 MiB limit
    per_graph = (2 * n * n * itemsize                # double-buffered S block
                 + 4 * n * F1 * 4)                   # y1/z1/diff2/acc2 f32 temps
    bb = vmem_budget // max(per_graph, 1)
    return int(max(1, min(block_b, B, bb)))


def model_forward(S, H1, b1, H2, b2, *, block_b=8, compute_dtype=jnp.float32):
    """Equivalent of Model.forward(S): returns squeeze(|gnn(ones, S)|)."""
    B, n, _ = S.shape
    K, F1 = H1.shape
    itemsize = jnp.dtype(compute_dtype).itemsize

    BB = _pick_block_b(block_b, B, n, F1, itemsize)
    B_pad = ((B + BB - 1) // BB) * BB
    if B_pad != B:
        S = jnp.pad(S, ((0, B_pad - B), (0, 0), (0, 0)))
    # TODO(synk): for very large graphs where even a single (1, n, n) block no
    # longer fits VMEM (notably v7x's 64 MiB), tile S over its row dim with a
    # reduction grid axis + pl.when init/finalize.

    S = S.astype(compute_dtype)
    H1 = H1.astype(jnp.float32)
    b1 = b1.astype(jnp.float32)
    H2T = H2.T.astype(jnp.float32)                   # (K, F1): taps lane-major
    b2 = b2.reshape(1, 1).astype(jnp.float32)

    grid = (B_pad // BB,)
    cost = pl.CostEstimate(
        flops=int(2 * B_pad * (K - 1) * n * n * F1   # layer-2 MXU diffusions
                  + 2 * B_pad * (K - 1) * n * n      # layer-1 matvecs
                  + 4 * B_pad * K * n * F1),         # feature mixes
        transcendentals=0,
        bytes_accessed=int(B_pad * n * n * itemsize + B_pad * n * 4),
    )

    out = pl.pallas_call(
        gnn_kernel,
        out_shape=jax.ShapeDtypeStruct((B_pad, n), jnp.float32),
        grid=grid,
        in_specs=[
            pl.BlockSpec((BB, n, n), lambda i: (i, 0, 0)),      # S, per block
            pl.BlockSpec((K, F1), lambda i: (0, 0)),            # H1, replicated
            pl.BlockSpec((1, F1), lambda i: (0, 0)),            # b1
            pl.BlockSpec((K, F1), lambda i: (0, 0)),            # H2^T
            pl.BlockSpec(memory_space=pltpu.MemorySpace.SMEM),  # b2 scalar
        ],
        out_specs=pl.BlockSpec((BB, n), lambda i: (i, 0)),
        compiler_params=pltpu.CompilerParams(
            dimension_semantics=("parallel",),
            vmem_limit_bytes=32 * 1024 * 1024,
        ),
        cost_estimate=cost,
    )(S, H1, b1, H2T, b2)

    out = out[:B]
    # torch.squeeze(p): drop all size-1 dims (matches torch semantics).
    return jnp.squeeze(out)


def reference_forward(S, H1, b1, H2, b2):
    """Pure-JAX reference of the same GNN, for a correctness check."""
    B, n, _ = S.shape
    K, F1 = H1.shape
    x = jnp.ones((B, n, 1), jnp.float32)

    diff = x
    y1 = jnp.zeros((B, n, F1), jnp.float32)
    for k in range(K):
        if k > 0:
            diff = jnp.einsum("bij,bjf->bif", S, diff)
        y1 = y1 + jnp.einsum("bif,fg->big", diff, H1[k:k + 1, :])
    z1 = jnp.maximum(y1 + b1[None, :, :], 0.0)

    diff2 = z1
    y2 = jnp.zeros((B, n, 1), jnp.float32)
    for k in range(K):
        if k > 0:
            diff2 = jnp.einsum("bij,bjf->bif", S, diff2)
        y2 = y2 + jnp.einsum("bif,fg->big", diff2, H2[:, k:k + 1])
    return jnp.squeeze(jnp.abs(y2 + b2[None, :, :]))


if __name__ == "__main__":
    # Small, deterministic shapes (2 grid steps of 8 graphs -> exercises the
    # parallel batch axis, which v7x can shard across its 2 TensorCores).
    B, n, K, F1 = 16, 16, 3, 32

    key = jax.random.PRNGKey(0)
    k_s, k_h1, k_b1, k_h2, k_b2 = jax.random.split(key, 5)

    # Deterministic symmetric graph-shift operators S (batch, n, n).
    A = jax.random.normal(k_s, (B, n, n), dtype=jnp.float32)
    S = 0.5 * (A + jnp.swapaxes(A, 1, 2)) / jnp.sqrt(float(n))

    # Deterministic GNN parameters (fan-in scaled).
    H1 = jax.random.normal(k_h1, (K, F1), dtype=jnp.float32) / jnp.sqrt(float(K))
    b1 = 0.1 * jax.random.normal(k_b1, (1, F1), dtype=jnp.float32)
    H2 = jax.random.normal(k_h2, (F1, K), dtype=jnp.float32) / jnp.sqrt(float(K * F1))
    b2 = 0.1 * jax.random.normal(k_b2, (1, 1), dtype=jnp.float32)

    p_ref = reference_forward(S, H1, b1, H2, b2)

    # f32 storage: exact semantics of the original module.
    p = jax.block_until_ready(model_forward(S, H1, b1, H2, b2))
    assert p.shape == (B, n), f"unexpected output shape {p.shape}"
    assert jnp.allclose(p, p_ref, atol=1e-4, rtol=1e-4), "f32 mismatch vs reference"

    # bf16 S storage (halves HBM traffic in the bandwidth-bound regime);
    # loose tolerance since S/Z1 are quantized to bf16 on the MXU path.
    p_bf16 = jax.block_until_ready(
        model_forward(S, H1, b1, H2, b2, compute_dtype=jnp.bfloat16))
    assert jnp.allclose(p_bf16, p_ref, atol=1e-1, rtol=1e-1), "bf16 mismatch vs reference"

    print("KERNEL_OK")
</pallas_src>

<mosaic_0001>
module attributes {stable_mosaic.version = 11 : i64} {
  func.func @gnn_kernel(%arg0: i32, %arg1: memref<8x16x16xf32, #tpu.memory_space<vmem>>, %arg2: memref<3x32xf32, #tpu.memory_space<vmem>>, %arg3: memref<1x32xf32, #tpu.memory_space<vmem>>, %arg4: memref<3x32xf32, #tpu.memory_space<vmem>>, %arg5: memref<1x1xf32, #tpu.memory_space<smem>>, %arg6: memref<8x16xf32, #tpu.memory_space<vmem>>) attributes {dimension_semantics = [#tpu.dimension_semantics<parallel>], iteration_bounds = array<i64: 2>, scalar_prefetch = 0 : i64, scratch_operands = 0 : i64, tpu.core_type = #tpu.core_type<tc>, window_params = [{transform_indices = @transform_0, window_bounds = array<i64: 8, 16, 16>}, {pipeline_mode = #tpu.pipeline_mode<synchronous>, transform_indices = @transform_1, window_bounds = array<i64: 3, 32>}, {pipeline_mode = #tpu.pipeline_mode<synchronous>, transform_indices = @transform_2, window_bounds = array<i64: 1, 32>}, {pipeline_mode = #tpu.pipeline_mode<synchronous>, transform_indices = @transform_3, window_bounds = array<i64: 3, 32>}, {transform_indices = @transform_4, window_bounds = array<i64: 1, 1>}, {transform_indices = @transform_5, window_bounds = array<i64: 8, 16>}]} {
    %c0 = arith.constant 0 : index
    %c0_0 = arith.constant 0 : index
    %c0_1 = arith.constant 0 : index
    %0 = vector.load %arg1[%c0, %c0_0, %c0_1] : memref<8x16x16xf32, #tpu.memory_space<vmem>>, vector<8x16x16xf32>
    %cst = arith.constant 1.000000e+00 : f32
    %1 = vector.broadcast %cst : f32 to vector<8x16xf32>
    %cst_2 = arith.constant 0.000000e+00 : f32
    %2 = vector.broadcast %cst_2 : f32 to vector<8x16x32xf32>
    %c0_3 = arith.constant 0 : index
    %c0_4 = arith.constant 0 : index
    %3 = vector.load %arg2[%c0_3, %c0_4] : memref<3x32xf32, #tpu.memory_space<vmem>>, vector<1x32xf32>
    %4 = vector.shape_cast %1 : vector<8x16xf32> to vector<8x16x1xf32>
    %5 = vector.shape_cast %3 : vector<1x32xf32> to vector<1x1x32xf32>
    %6 = vector.broadcast %4 : vector<8x16x1xf32> to vector<8x16x32xf32>
    %7 = vector.broadcast %5 : vector<1x1x32xf32> to vector<8x16x32xf32>
    %8 = arith.mulf %6, %7 : vector<8x16x32xf32>
    %9 = arith.addf %2, %8 : vector<8x16x32xf32>
    %10 = vector.shape_cast %1 : vector<8x16xf32> to vector<8x1x16xf32>
    %11 = vector.broadcast %10 : vector<8x1x16xf32> to vector<8x16x16xf32>
    %12 = arith.mulf %0, %11 : vector<8x16x16xf32>
    %cst_5 = arith.constant dense<0.000000e+00> : vector<8x16xf32>
    %13 = vector.multi_reduction <add>, %12, %cst_5 [2] : vector<8x16x16xf32> to vector<8x16xf32>
    %c1 = arith.constant 1 : index
    %c0_6 = arith.constant 0 : index
    %14 = vector.load %arg2[%c1, %c0_6] : memref<3x32xf32, #tpu.memory_space<vmem>>, vector<1x32xf32>
    %15 = vector.shape_cast %13 : vector<8x16xf32> to vector<8x16x1xf32>
    %16 = vector.shape_cast %14 : vector<1x32xf32> to vector<1x1x32xf32>
    %17 = vector.broadcast %15 : vector<8x16x1xf32> to vector<8x16x32xf32>
    %18 = vector.broadcast %16 : vector<1x1x32xf32> to vector<8x16x32xf32>
    %19 = arith.mulf %17, %18 : vector<8x16x32xf32>
    %20 = arith.addf %9, %19 : vector<8x16x32xf32>
    %21 = vector.shape_cast %13 : vector<8x16xf32> to vector<8x1x16xf32>
    %22 = vector.broadcast %21 : vector<8x1x16xf32> to vector<8x16x16xf32>
    %23 = arith.mulf %0, %22 : vector<8x16x16xf32>
    %cst_7 = arith.constant dense<0.000000e+00> : vector<8x16xf32>
    %24 = vector.multi_reduction <add>, %23, %cst_7 [2] : vector<8x16x16xf32> to vector<8x16xf32>
    %c2 = arith.constant 2 : index
    %c0_8 = arith.constant 0 : index
    %25 = vector.load %arg2[%c2, %c0_8] : memref<3x32xf32, #tpu.memory_space<vmem>>, vector<1x32xf32>
    %26 = vector.shape_cast %24 : vector<8x16xf32> to vector<8x16x1xf32>
    %27 = vector.shape_cast %25 : vector<1x32xf32> to vector<1x1x32xf32>
    %28 = vector.broadcast %26 : vector<8x16x1xf32> to vector<8x16x32xf32>
    %29 = vector.broadcast %27 : vector<1x1x32xf32> to vector<8x16x32xf32>
    %30 = arith.mulf %28, %29 : vector<8x16x32xf32>
    %31 = arith.addf %20, %30 : vector<8x16x32xf32>
    %c0_9 = arith.constant 0 : index
    %c0_10 = arith.constant 0 : index
    %32 = vector.load %arg3[%c0_9, %c0_10] : memref<1x32xf32, #tpu.memory_space<vmem>>, vector<1x32xf32>
    %33 = vector.shape_cast %32 : vector<1x32xf32> to vector<1x1x32xf32>
    %34 = vector.broadcast %33 : vector<1x1x32xf32> to vector<8x16x32xf32>
    %35 = arith.addf %31, %34 : vector<8x16x32xf32>
    %cst_11 = arith.constant 0.000000e+00 : f32
    %36 = vector.broadcast %cst_11 : f32 to vector<8x16x32xf32>
    %37 = arith.maximumf %35, %36 : vector<8x16x32xf32>
    %cst_12 = arith.constant 0.000000e+00 : f32
    %38 = vector.broadcast %cst_12 : f32 to vector<8x16x32xf32>
    %c0_13 = arith.constant 0 : index
    %c0_14 = arith.constant 0 : index
    %39 = vector.load %arg4[%c0_13, %c0_14] : memref<3x32xf32, #tpu.memory_space<vmem>>, vector<1x32xf32>
    %40 = vector.shape_cast %39 : vector<1x32xf32> to vector<1x1x32xf32>
    %41 = vector.broadcast %40 : vector<1x1x32xf32> to vector<8x16x32xf32>
    %42 = arith.mulf %37, %41 : vector<8x16x32xf32>
    %43 = arith.addf %38, %42 : vector<8x16x32xf32>
    "tpu.trace_start"() <{level = 10 : i32, message = "bij,bjf->bif"}> : () -> ()
    %cst_15 = arith.constant dense<0.000000e+00> : vector<8x16x32xf32>
    %44 = tpu.matmul %0, %37, %cst_15 {dimension_numbers = #tpu.dot_dimension_numbers<[2], [1], [1], [2], [0, 0, 0, 1, 1, 2], [0], [0]>} : vector<8x16x16xf32>, vector<8x16x32xf32>, vector<8x16x32xf32> -> vector<8x16x32xf32>
    "tpu.trace_stop"() : () -> ()
    %c1_16 = arith.constant 1 : index
    %c0_17 = arith.constant 0 : index
    %45 = vector.load %arg4[%c1_16, %c0_17] : memref<3x32xf32, #tpu.memory_space<vmem>>, vector<1x32xf32>
    %46 = vector.shape_cast %45 : vector<1x32xf32> to vector<1x1x32xf32>
    %47 = vector.broadcast %46 : vector<1x1x32xf32> to vector<8x16x32xf32>
    %48 = arith.mulf %44, %47 : vector<8x16x32xf32>
    %49 = arith.addf %43, %48 : vector<8x16x32xf32>
    "tpu.trace_start"() <{level = 10 : i32, message = "bij,bjf->bif"}> : () -> ()
    %cst_18 = arith.constant dense<0.000000e+00> : vector<8x16x32xf32>
    %50 = tpu.matmul %0, %44, %cst_18 {dimension_numbers = #tpu.dot_dimension_numbers<[2], [1], [1], [2], [0, 0, 0, 1, 1, 2], [0], [0]>} : vector<8x16x16xf32>, vector<8x16x32xf32>, vector<8x16x32xf32> -> vector<8x16x32xf32>
    "tpu.trace_stop"() : () -> ()
    %c2_19 = arith.constant 2 : index
    %c0_20 = arith.constant 0 : index
    %51 = vector.load %arg4[%c2_19, %c0_20] : memref<3x32xf32, #tpu.memory_space<vmem>>, vector<1x32xf32>
    %52 = vector.shape_cast %51 : vector<1x32xf32> to vector<1x1x32xf32>
    %53 = vector.broadcast %52 : vector<1x1x32xf32> to vector<8x16x32xf32>
    %54 = arith.mulf %50, %53 : vector<8x16x32xf32>
    %55 = arith.addf %49, %54 : vector<8x16x32xf32>
    %cst_21 = arith.constant dense<0.000000e+00> : vector<8x16xf32>
    %56 = vector.multi_reduction <add>, %55, %cst_21 [2] : vector<8x16x32xf32> to vector<8x16xf32>
    %c0_22 = arith.constant 0 : index
    %c0_23 = arith.constant 0 : index
    %57 = memref.load %arg5[%c0_22, %c0_23] : memref<1x1xf32, #tpu.memory_space<smem>>
    %58 = vector.broadcast %57 : f32 to vector<8x16xf32>
    %59 = arith.addf %56, %58 : vector<8x16xf32>
    %60 = math.absf %59 : vector<8x16xf32>
    %c0_24 = arith.constant 0 : index
    %c0_25 = arith.constant 0 : index
    %61 = vector.load %arg6[%c0_24, %c0_25] : memref<8x16xf32, #tpu.memory_space<vmem>>, vector<8x16xf32>
    tpu.vector_store %arg6[%c0_24, %c0_25], %60 {strides = array<i32>} : memref<8x16xf32, #tpu.memory_space<vmem>>, vector<8x16xf32>,
    return
  }
  func.func @transform_0(%arg0: i32) -> (i32, i32, i32) {
    %c0_i32 = arith.constant 0 : i32
    %c0_i32_0 = arith.constant 0 : i32
    %c0_i32_1 = arith.constant 0 : i32
    return %arg0, %c0_i32, %c0_i32_0 : i32, i32, i32
  }
  func.func @transform_1(%arg0: i32) -> (i32, i32) {
    %c0_i32 = arith.constant 0 : i32
    %c0_i32_0 = arith.constant 0 : i32
    %c0_i32_1 = arith.constant 0 : i32
    return %c0_i32, %c0_i32_0 : i32, i32
  }
  func.func @transform_2(%arg0: i32) -> (i32, i32) {
    %c0_i32 = arith.constant 0 : i32
    %c0_i32_0 = arith.constant 0 : i32
    %c0_i32_1 = arith.constant 0 : i32
    return %c0_i32, %c0_i32_0 : i32, i32
  }
  func.func @transform_3(%arg0: i32) -> (i32, i32) {
    %c0_i32 = arith.constant 0 : i32
    %c0_i32_0 = arith.constant 0 : i32
    %c0_i32_1 = arith.constant 0 : i32
    return %c0_i32, %c0_i32_0 : i32, i32
  }
  func.func @transform_4(%arg0: i32) -> (i32, i32) {
    %c0_i32 = arith.constant 0 : i32
    %c0_i32_0 = arith.constant 0 : i32
    %c0_i32_1 = arith.constant 0 : i32
    return %c0_i32, %c0_i32_0 : i32, i32
  }
  func.func @transform_5(%arg0: i32) -> (i32, i32) {
    %c0_i32 = arith.constant 0 : i32
    %c0_i32_0 = arith.constant 0 : i32
    return %arg0, %c0_i32 : i32, i32
  }
}

</mosaic_0001>

<llo_original>
// kernel: tpu_custom_call.1
$region0: #{tpu_custom_call.1}
  #allocation0 [shape = 'u32[]', space=smem, size = 0x4, offset = 0x4, fixed_abs, tag = 'smem constant byte address 0x4 - core index']
  #allocation1 [shape = 'u32[144,128]{1,0:T(1,128)}', space=vmem, size = 0x12000, scoped, tag = 'internal scratch']
  #allocation2 [shape = 'f32[1,1]{1,0:T(1,128)S(6)}', space=smem, size = 0x200, scoped, tag = 'scoped memory for tpu_custom_call.1']
  %s0 = inlined_call_operand.hbm [shape: f32[16,16,16], index: 0, kind: input, shape index: {}]
  %s1 = inlined_call_operand.hbm [shape: f32[3,32], index: 1, kind: input, shape index: {}]
  %s2 = inlined_call_operand.vmem [shape: f32[1,32], index: 2, kind: input, shape index: {}]
  %s3 = inlined_call_operand.vmem [shape: f32[3,32], index: 3, kind: input, shape index: {}]
  %s4 = inlined_call_operand.<no memory space> [shape: f32[1,1], index: 4, kind: input, shape index: {}]
  %s5 = inlined_call_operand.hbm [shape: f32[16,16], index: 5, kind: output, shape index: {}]
  %s6 = sld [smem:[#allocation0]]
  $region61: #{tpu_custom_call.1} parent=0
    _
  %s8 = ssub.s32 1, %s6
  %s9 = scalar_select 0, %s8, %s6
  %10 = sst [smem:[#allocation2]] %s4
  $region1: #{tpu_custom_call.1} parent=0
    #allocation3 [shape = 'u8[131072]{0}', space=vmem, size = 0x20000, scoped, tag = 'input window, operand 0']
    #allocation4 [shape = 's32[2]{0}', space=sflag, size = 0x8, scoped, tag = 'scoped memory for tpu_custom_call.1']
    #allocation5 [shape = 's32[2]{0}', space=sflag, size = 0x8, scoped, tag = 'scoped memory for tpu_custom_call.1']
    #allocation6 [shape = 'u8[2048]{0}', space=vmem, size = 0x800, scoped, tag = 'input window, operand 1, single buffered']
    #allocation7 [shape = 's32[1]{0}', space=sflag, size = 0x4, scoped, tag = 'scoped memory for tpu_custom_call.1']
    #allocation8 [shape = 'u8[8192]{0}', space=vmem, size = 0x2000, scoped, tag = 'output window, operand 0']
    %11 = vsyncpa [#allocation4], 0
    %s12 = scalar_lea.sflag [#allocation4], 1
    %13 = vsyncpa %s12, 0
    %14 = vsyncpa [#allocation7], 0
    %15 = vsyncpa [#allocation5], 0
    %s16 = scalar_lea.sflag [#allocation5], 1
    %17 = vsyncpa %s16, 0
    loop: start=0, step=1, limit=4
    $region2: #{tpu_custom_call.1} parent=1 // loop_pre_header
      _
    $region3: #{tpu_custom_call.1} parent=1 // loop_header
      %s19 = sphi 0, %s23
      %p20 = scmp.ge.s32.totalorder %s19, 4
      %s29 = sphi 0, %s31
      %s32 = sphi 0, %s29
      %s33 = sphi 0, %s32
      %s49 = sphi 0, %s33
      %s53 = sphi 0, %s53
      %s55 = sphi 0, %s53
      %s56 = sphi 0, %s55
      %s70 = sphi 0, %s56
      %s74 = sphi 0, %s74
      %s76 = sphi 0, %s74
      %s77 = sphi 0, %s76
      %s91 = sphi 0, %s77
      %s95 = sphi 0, %s95
      %s97 = sphi 0, %s95
      %s98 = sphi 0, %s97
      %s112 = sphi 0, %s98
      %s116 = sphi 0, %s116
      %s118 = sphi 0, %s116
      %s119 = sphi 0, %s118
      %s133 = sphi 0, %s119
      %s139 = sphi 0, %s141
      %s142 = sphi 0, %s139
      %s143 = sphi 0, %s142
      %s159 = sphi 0, %s143
    $region4: #{tpu_custom_call.1} parent=1 // loop_header_branch
      %22 = sbr.rel (%p20) target = $region8
    $region5: #{tpu_custom_call.1} parent=1 // loop_body
      %s24 = ssub.s32 %s19, 1
      %s25 = ssub.s32 %s19, 2
      %s26 = sadd.s32 %s19, 1
      %s27 = ssub.s32 %s19, %s26
      %p28 = scmp.eq.s32.totalorder %s27, 0
      %s30 = sadd.s32 %s29, 1
      %s31 = scalar_select %p28, %s29, %s30
      %p34 = pneg %p28
      %p35 = scmp.eq.s32.totalorder %s19, 1
      %p36 = por %p34, %p35
      %p37 = scmp.ne.s32.totalorder %s29, %s32
      %p38 = scmp.eq.s32.totalorder %s19, 0
      %p39 = por %p37, %p38
      %p40 = scmp.ne.s32.totalorder %s29, %s32
      %p41 = scmp.eq.s32.totalorder %s24, 1
      %p42 = por %p40, %p41
      %p43 = scmp.ne.s32.totalorder %s32, %s33
      %p44 = scmp.eq.s32.totalorder %s24, 0
      %p45 = por %p43, %p44
      %p46 = scmp.ne.s32.totalorder %s32, %s33
      %p47 = scmp.eq.s32.totalorder %s25, 1
      %p48 = por %p46, %p47
      %p50 = scmp.ne.s32.totalorder %s33, %s49
      %p51 = scmp.eq.s32.totalorder %s25, 0
      %p52 = por %p50, %p51
      %s54 = sadd.s32 %s53, 1
      %p57 = scmp.eq.s32.totalorder %s19, 1
      %p58 = scmp.ne.s32.totalorder %s53, %s55
      %p59 = scmp.eq.s32.totalorder %s19, 0
      %p60 = por %p58, %p59
      %p61 = scmp.ne.s32.totalorder %s53, %s55
      %p62 = scmp.eq.s32.totalorder %s24, 1
      %p63 = por %p61, %p62
      %p64 = scmp.ne.s32.totalorder %s55, %s56
      %p65 = scmp.eq.s32.totalorder %s24, 0
      %p66 = por %p64, %p65
      %p67 = scmp.ne.s32.totalorder %s55, %s56
      %p68 = scmp.eq.s32.totalorder %s25, 1
      %p69 = por %p67, %p68
      %p71 = scmp.ne.s32.totalorder %s56, %s70
      %p72 = scmp.eq.s32.totalorder %s25, 0
      %p73 = por %p71, %p72
      %s75 = sadd.s32 %s74, 1
      %p78 = scmp.eq.s32.totalorder %s19, 1
      %p79 = scmp.ne.s32.totalorder %s74, %s76
      %p80 = scmp.eq.s32.totalorder %s19, 0
      %p81 = por %p79, %p80
      %p82 = scmp.ne.s32.totalorder %s74, %s76
      %p83 = scmp.eq.s32.totalorder %s24, 1
      %p84 = por %p82, %p83
      %p85 = scmp.ne.s32.totalorder %s76, %s77
      %p86 = scmp.eq.s32.totalorder %s24, 0
      %p87 = por %p85, %p86
      %p88 = scmp.ne.s32.totalorder %s76, %s77
      %p89 = scmp.eq.s32.totalorder %s25, 1
      %p90 = por %p88, %p89
      %p92 = scmp.ne.s32.totalorder %s77, %s91
      %p93 = scmp.eq.s32.totalorder %s25, 0
      %p94 = por %p92, %p93
      %s96 = sadd.s32 %s95, 1
      %p99 = scmp.eq.s32.totalorder %s19, 1
      %p100 = scmp.ne.s32.totalorder %s95, %s97
      %p101 = scmp.eq.s32.totalorder %s19, 0
      %p102 = por %p100, %p101
      %p103 = scmp.ne.s32.totalorder %s95, %s97
      %p104 = scmp.eq.s32.totalorder %s24, 1
      %p105 = por %p103, %p104
      %p106 = scmp.ne.s32.totalorder %s97, %s98
      %p107 = scmp.eq.s32.totalorder %s24, 0
      %p108 = por %p106, %p107
      %p109 = scmp.ne.s32.totalorder %s97, %s98
      %p110 = scmp.eq.s32.totalorder %s25, 1
      %p111 = por %p109, %p110
      %p113 = scmp.ne.s32.totalorder %s98, %s112
      %p114 = scmp.eq.s32.totalorder %s25, 0
      %p115 = por %p113, %p114
      %s117 = sadd.s32 %s116, 1
      %p120 = scmp.eq.s32.totalorder %s19, 1
      %p121 = scmp.ne.s32.totalorder %s116, %s118
      %p122 = scmp.eq.s32.totalorder %s19, 0
      %p123 = por %p121, %p122
      %p124 = scmp.ne.s32.totalorder %s116, %s118
      %p125 = scmp.eq.s32.totalorder %s24, 1
      %p126 = por %p124, %p125
      %p127 = scmp.ne.s32.totalorder %s118, %s119
      %p128 = scmp.eq.s32.totalorder %s24, 0
      %p129 = por %p127, %p128
      %p130 = scmp.ne.s32.totalorder %s118, %s119
      %p131 = scmp.eq.s32.totalorder %s25, 1
      %p132 = por %p130, %p131
      %p134 = scmp.ne.s32.totalorder %s119, %s133
      %p135 = scmp.eq.s32.totalorder %s25, 0
      %p136 = por %p134, %p135
      %s137 = ssub.s32 %s19, %s26
      %p138 = scmp.eq.s32.totalorder %s137, 0
      %s140 = sadd.s32 %s139, 1
      %s141 = scalar_select %p138, %s139, %s140
      %p144 = pneg %p138
      %p145 = scmp.eq.s32.totalorder %s19, 1
      %p146 = por %p144, %p145
      %p147 = scmp.ne.s32.totalorder %s139, %s142
      %p148 = scmp.eq.s32.totalorder %s19, 0
      %p149 = por %p147, %p148
      %p150 = scmp.ne.s32.totalorder %s139, %s142
      %p151 = scmp.eq.s32.totalorder %s24, 1
      %p152 = por %p150, %p151
      %p153 = scmp.ne.s32.totalorder %s142, %s143
      %p154 = scmp.eq.s32.totalorder %s24, 0
      %p155 = por %p153, %p154
      %p156 = scmp.ne.s32.totalorder %s142, %s143
      %p157 = scmp.eq.s32.totalorder %s25, 1
      %p158 = por %p156, %p157
      %p160 = scmp.ne.s32.totalorder %s143, %s159
      %p161 = scmp.eq.s32.totalorder %s25, 0
      %p162 = por %p160, %p161
      %p163 = scmp.le.s32.totalorder 1, %s19
      %p164 = scmp.lt.s32.totalorder %s19, 3
      %p165 = pnand %p163, %p164
      %p166 = pneg %p165
      // Predicated region
      $region9: #{tpu_custom_call.1} parent=5 // pred_check
        _
      $region10: #{tpu_custom_call.1} parent=5 // pred_check_branch
        %168 = sbr.rel (%p165) target = $region12
      $region11: #{tpu_custom_call.1} parent=5 // pred_region
        %s169 = ssub.s32 %s19, 1
        // Predicated region
        $region13: #{tpu_custom_call.1} parent=11 // pred_check
          %p170 = pneg %p66
        $region14: #{tpu_custom_call.1} parent=11 // pred_check_branch
          %172 = sbr.rel (%p170) target = $region16
        $region15: #{tpu_custom_call.1} parent=11 // pred_region
          %s174 = ssub.s32 64, 64
          %175 = vsyncadd [#allocation7], %s174
          %s177 = sshll.u32 [#allocation6], 4
          %s178 = int_to_ptr.vmem [resolvable:$true] %s177
          %180 = dma.hbm_to_vmem [thread:$0]  %s1, 64, %s178, [#allocation7]
        $region16: #{tpu_custom_call.1} parent=11 // pred_fallthru
          _
        // Predicated region
        $region17: #{tpu_custom_call.1} parent=11 // pred_check
          %p181 = pneg %p87
        $region18: #{tpu_custom_call.1} parent=11 // pred_check_branch
          %183 = sbr.rel (%p181) target = $region20
        $region19: #{tpu_custom_call.1} parent=11 // pred_region
          _
        $region20: #{tpu_custom_call.1} parent=11 // pred_fallthru
          _
        // Predicated region
        $region21: #{tpu_custom_call.1} parent=11 // pred_check
          %p184 = pneg %p108
        $region22: #{tpu_custom_call.1} parent=11 // pred_check_branch
          %186 = sbr.rel (%p184) target = $region24
        $region23: #{tpu_custom_call.1} parent=11 // pred_region
          _
        $region24: #{tpu_custom_call.1} parent=11 // pred_fallthru
          _
        // Predicated region
        $region25: #{tpu_custom_call.1} parent=11 // pred_check
          %p187 = pneg %p129
        $region26: #{tpu_custom_call.1} parent=11 // pred_check_branch
          %189 = sbr.rel (%p187) target = $region28
        $region27: #{tpu_custom_call.1} parent=11 // pred_region
          _
        $region28: #{tpu_custom_call.1} parent=11 // pred_fallthru
          _
      $region12: #{tpu_custom_call.1} parent=5 // pred_fallthru
        _
      %p190 = scmp.lt.s32.totalorder %s19, 2
      // Predicated region
      $region29: #{tpu_custom_call.1} parent=5 // pred_check
        %p191 = pneg %p190
      $region30: #{tpu_custom_call.1} parent=5 // pred_check_branch
        %193 = sbr.rel (%p191) target = $region32
      $region31: #{tpu_custom_call.1} parent=5 // pred_region
        // Predicated region
        $region33: #{tpu_custom_call.1} parent=31 // pred_check
          %p194 = pneg %p39
        $region34: #{tpu_custom_call.1} parent=31 // pred_check_branch
          %196 = sbr.rel (%p194) target = $region36
        $region35: #{tpu_custom_call.1} parent=31 // pred_region
          %s197 = sand.u32 %s29, 1
          %s198 = scalar_lea.sflag [#allocation4], %s197
          %s199 = sand.u32 %s29, 1
          %s200 = smul.addr %s199, 128
          %s201 = scalar_lea.vmem [#allocation3], %s200
          %s202 = smul.u32 8, %s19
          %s204 = ssub.s32 2048, 2048
          %205 = vsyncadd %s198, %s204
          %s206 = smul.addr %s202, 2
          %s207 = smul.addr %s206, 128
          %s208 = scalar_lea.hbm %s0, %s207
          %s209 = sshll.u32 %s201, 4
          %s210 = int_to_ptr.vmem [resolvable:$true] %s209
          %215 = dma.hbm_to_vmem [thread:$0]  %s208, 2048, %s210, %s198, 128, 128, 8
        $region36: #{tpu_custom_call.1} parent=31 // pred_fallthru
          _
      $region32: #{tpu_custom_call.1} parent=5 // pred_fallthru
        _
      %p216 = scmp.le.s32.totalorder 1, %s19
      %p217 = scmp.lt.s32.totalorder %s19, 3
      %p218 = pnand %p216, %p217
      %p219 = pneg %p218
      // Predicated region
      $region37: #{tpu_custom_call.1} parent=5 // pred_check
        _
      $region38: #{tpu_custom_call.1} parent=5 // pred_check_branch
        %221 = sbr.rel (%p218) target = $region40
      $region39: #{tpu_custom_call.1} parent=5 // pred_region
        %s222 = ssub.s32 %s19, 1
        %s223 = sand.u32 %s32, 1
        %s224 = scalar_lea.sflag [#allocation4], %s223
        %s225 = sand.u32 %s32, 1
        %s226 = smul.addr %s225, 128
        %s227 = scalar_lea.vmem [#allocation3], %s226
        // Predicated region
        $region41: #{tpu_custom_call.1} parent=39 // pred_check
          %p228 = pneg %p45
        $region42: #{tpu_custom_call.1} parent=39 // pred_check_branch
          %230 = sbr.rel (%p228) target = $region44
        $region43: #{tpu_custom_call.1} parent=39 // pred_region
          %231 = dma.done %s224, 2048
        $region44: #{tpu_custom_call.1} parent=39 // pred_fallthru
          _
        // Predicated region
        $region45: #{tpu_custom_call.1} parent=39 // pred_check
          %p232 = pneg %p66
        $region46: #{tpu_custom_call.1} parent=39 // pred_check_branch
          %234 = sbr.rel (%p232) target = $region48
        $region47: #{tpu_custom_call.1} parent=39 // pred_region
          %235 = dma.done [#allocation7], 64
        $region48: #{tpu_custom_call.1} parent=39 // pred_fallthru
          _
        %s236 = sand.u32 %s32, 1
        %s237 = scalar_lea.sflag [#allocation4], %s236
        %s238 = sand.u32 %s32, 1
        %s239 = smul.addr %s238, 128
        %s240 = scalar_lea.vmem [#allocation3], %s239
        %p241 = pneg %p45
        %p242 = pneg %p42
        %p243 = pneg %p66
        %p244 = pneg %p63
        %p245 = pneg %p87
        %p246 = pneg %p84
        %p247 = pneg %p108
        %p248 = pneg %p105
        %p249 = pneg %p129
        %p250 = pneg %p126
        %p251 = pneg %p155
        %p252 = pneg %p152
        %s253 = sand.u32 %s142, 1
        %s254 = scalar_lea.sflag [#allocation5], %s253
        %s255 = sand.u32 %s142, 1
        %s256 = smul.addr %s255, 8
        %s257 = scalar_lea.vmem [#allocation8], %s256
        %s258 = smul.u32 8, %s24
        %v259 = vld [vmem:[%s227] sm:$0xff]
        %v260 = vld [vmem:[%s227 + $0x8] sm:$0xff]
        %v261 = vld [vmem:[%s227 + $0x10] sm:$0xff]
        %v262 = vld [vmem:[%s227 + $0x18] sm:$0xff]
        %v263 = vld [vmem:[%s227 + $0x20] sm:$0xff]
        %v264 = vld [vmem:[%s227 + $0x28] sm:$0xff]
        %v265 = vld [vmem:[%s227 + $0x30] sm:$0xff]
        %v266 = vld [vmem:[%s227 + $0x38] sm:$0xff]
        %v267 = vld [vmem:[%s227 + $0x40] sm:$0xff]
        %v268 = vld [vmem:[%s227 + $0x48] sm:$0xff]
        %v269 = vld [vmem:[%s227 + $0x50] sm:$0xff]
        %v270 = vld [vmem:[%s227 + $0x58] sm:$0xff]
        %v271 = vld [vmem:[%s227 + $0x60] sm:$0xff]
        %v272 = vld [vmem:[%s227 + $0x68] sm:$0xff]
        %v273 = vld [vmem:[%s227 + $0x70] sm:$0xff]
        %v274 = vld [vmem:[%s227 + $0x78] sm:$0xff]
        %v275 = vld [vmem:[#allocation6] sm:$0x1]
        %v276 = vlaneseq
        %v277 = vshrl.u32 %v276, 7
        %v278 = vsub.s32 0, %v277
        %v279 = vrot.slane %v275, %v278
        %v280 = vadd.f32 %v279, 0.0
        %vm281 = vcmask 130048
        %v282 = vsel %vm281, %v259, 0.0
        %283 = vadd.xlane.f32.xlu0 %v282
        %v284 = vpop.xlane.xlu0 %283
        %v285 = vsel %vm281, %v260, 0.0
        %286 = vadd.xlane.f32.xlu0 %v285
        %v287 = vpop.xlane.xlu0 %286
        %v288 = vsel %vm281, %v261, 0.0
        %289 = vadd.xlane.f32.xlu0 %v288
        %v290 = vpop.xlane.xlu0 %289
        %v291 = vsel %vm281, %v262, 0.0
        %292 = vadd.xlane.f32.xlu0 %v291
        %v293 = vpop.xlane.xlu0 %292
        %v294 = vsel %vm281, %v263, 0.0
        %295 = vadd.xlane.f32.xlu0 %v294
        %v296 = vpop.xlane.xlu0 %295
        %v297 = vsel %vm281, %v264, 0.0
        %298 = vadd.xlane.f32.xlu0 %v297
        %v299 = vpop.xlane.xlu0 %298
        %v300 = vsel %vm281, %v265, 0.0
        %301 = vadd.xlane.f32.xlu0 %v300
        %v302 = vpop.xlane.xlu0 %301
        %v303 = vsel %vm281, %v266, 0.0
        %304 = vadd.xlane.f32.xlu0 %v303
        %v305 = vpop.xlane.xlu0 %304
        %v306 = vsel %vm281, %v267, 0.0
        %307 = vadd.xlane.f32.xlu0 %v306
        %v308 = vpop.xlane.xlu0 %307
        %v309 = vsel %vm281, %v268, 0.0
        %310 = vadd.xlane.f32.xlu0 %v309
        %v311 = vpop.xlane.xlu0 %310
        %v312 = vsel %vm281, %v269, 0.0
        %313 = vadd.xlane.f32.xlu0 %v312
        %v314 = vpop.xlane.xlu0 %313
        %v315 = vsel %vm281, %v270, 0.0
        %316 = vadd.xlane.f32.xlu0 %v315
        %v317 = vpop.xlane.xlu0 %316
        %v318 = vsel %vm281, %v271, 0.0
        %319 = vadd.xlane.f32.xlu0 %v318
        %v320 = vpop.xlane.xlu0 %319
        %v321 = vsel %vm281, %v272, 0.0
        %322 = vadd.xlane.f32.xlu0 %v321
        %v323 = vpop.xlane.xlu0 %322
        %v324 = vsel %vm281, %v273, 0.0
        %325 = vadd.xlane.f32.xlu0 %v324
        %v326 = vpop.xlane.xlu0 %325
        %v327 = vsel %vm281, %v274, 0.0
        %328 = vadd.xlane.f32.xlu0 %v327
        %v329 = vpop.xlane.xlu0 %328
        %v330 = vld [vmem:[#allocation6 + $0x1] sm:$0x1]
        %v331 = vlaneseq
        %v332 = vshrl.u32 %v331, 7
        %v333 = vsub.s32 0, %v332
        %v334 = vrot.slane %v330, %v333
        %v335 = vmul.f32 %v284, %v334
        %v336 = vmul.f32 %v287, %v334
        %v337 = vmul.f32 %v290, %v334
        %v338 = vmul.f32 %v293, %v334
        %v339 = vmul.f32 %v296, %v334
        %v340 = vmul.f32 %v299, %v334
        %v341 = vmul.f32 %v302, %v334
        %v342 = vmul.f32 %v305, %v334
        %v343 = vmul.f32 %v308, %v334
        %v344 = vmul.f32 %v311, %v334
        %v345 = vmul.f32 %v314, %v334
        %v346 = vmul.f32 %v317, %v334
        %v347 = vmul.f32 %v320, %v334
        %v348 = vmul.f32 %v323, %v334
        %v349 = vmul.f32 %v326, %v334
        %v350 = vmul.f32 %v329, %v334
        %v351 = vadd.f32 %v280, %v335
        %v352 = vadd.f32 %v280, %v336
        %v353 = vadd.f32 %v280, %v337
        %v354 = vadd.f32 %v280, %v338
        %v355 = vadd.f32 %v280, %v339
        %v356 = vadd.f32 %v280, %v340
        %v357 = vadd.f32 %v280, %v341
        %v358 = vadd.f32 %v280, %v342
        %v359 = vadd.f32 %v280, %v343
        %v360 = vadd.f32 %v280, %v344
        %v361 = vadd.f32 %v280, %v345
        %v362 = vadd.f32 %v280, %v346
        %v363 = vadd.f32 %v280, %v347
        %v364 = vadd.f32 %v280, %v348
        %v365 = vadd.f32 %v280, %v349
        %v366 = vadd.f32 %v280, %v350
        %v383 = vlaneseq
        %v384 = vand.u32 %v383, 127
        %v385 = vlaneseq
        %v386 = vshrl.u32 %v385, 7
        %v387 = vsub.s32 %v384, %v386
        %v388 = vrot.slane %v284, %v387
        %v389 = vadd.s32 %v384, 4294967288
        %v390 = vlaneseq
        %v391 = vshrl.u32 %v390, 7
        %v392 = vsub.s32 %v389, %v391
        %v393 = vrot.slane %v287, %v392
        %vm394 = vcmask 130112
        %v395 = vsel %vm394, %v393, %v388
        %v396 = vlaneseq
        %v397 = vshrl.u32 %v396, 7
        %v398 = vsub.s32 %v384, %v397
        %v399 = vrot.slane %v290, %v398
        %v400 = vlaneseq
        %v401 = vshrl.u32 %v400, 7
        %v402 = vsub.s32 %v389, %v401
        %v403 = vrot.slane %v293, %v402
        %v404 = vsel %vm394, %v403, %v399
        %v405 = vlaneseq
        %v406 = vshrl.u32 %v405, 7
        %v407 = vsub.s32 %v384, %v406
        %v408 = vrot.slane %v296, %v407
        %v409 = vlaneseq
        %v410 = vshrl.u32 %v409, 7
        %v411 = vsub.s32 %v389, %v410
        %v412 = vrot.slane %v299, %v411
        %v413 = vsel %vm394, %v412, %v408
        %v414 = vlaneseq
        %v415 = vshrl.u32 %v414, 7
        %v416 = vsub.s32 %v384, %v415
        %v417 = vrot.slane %v302, %v416
        %v418 = vlaneseq
        %v419 = vshrl.u32 %v418, 7
        %v420 = vsub.s32 %v389, %v419
        %v421 = vrot.slane %v305, %v420
        %v422 = vsel %vm394, %v421, %v417
        %v423 = vlaneseq
        %v424 = vshrl.u32 %v423, 7
        %v425 = vsub.s32 %v384, %v424
        %v426 = vrot.slane %v308, %v425
        %v427 = vlaneseq
        %v428 = vshrl.u32 %v427, 7
        %v429 = vsub.s32 %v389, %v428
        %v430 = vrot.slane %v311, %v429
        %v431 = vsel %vm394, %v430, %v426
        %v432 = vlaneseq
        %v433 = vshrl.u32 %v432, 7
        %v434 = vsub.s32 %v384, %v433
        %v435 = vrot.slane %v314, %v434
        %v436 = vlaneseq
        %v437 = vshrl.u32 %v436, 7
        %v438 = vsub.s32 %v389, %v437
        %v439 = vrot.slane %v317, %v438
        %v440 = vsel %vm394, %v439, %v435
        %v441 = vlaneseq
        %v442 = vshrl.u32 %v441, 7
        %v443 = vsub.s32 %v384, %v442
        %v444 = vrot.slane %v320, %v443
        %v445 = vlaneseq
        %v446 = vshrl.u32 %v445, 7
        %v447 = vsub.s32 %v389, %v446
        %v448 = vrot.slane %v323, %v447
        %v449 = vsel %vm394, %v448, %v444
        %v450 = vlaneseq
        %v451 = vshrl.u32 %v450, 7
        %v452 = vsub.s32 %v384, %v451
        %v453 = vrot.slane %v326, %v452
        %v454 = vlaneseq
        %v455 = vshrl.u32 %v454, 7
        %v456 = vsub.s32 %v389, %v455
        %v457 = vrot.slane %v329, %v456
        %v458 = vsel %vm394, %v457, %v453
        %vm459 = vcmask 1041409
        %vm460 = vcmask 1042434
        %v461 = vsel %vm460, %v395, %v395
        %vm462 = vcmask 1043459
        %v463 = vsel %vm462, %v395, %v461
        %vm464 = vcmask 1044484
        %v465 = vsel %vm464, %v395, %v463
        %vm466 = vcmask 1045509
        %v467 = vsel %vm466, %v395, %v465
        %vm468 = vcmask 1046534
        %v469 = vsel %vm468, %v395, %v467
        %vm470 = vcmask 1047559
        %v471 = vsel %vm470, %v395, %v469
        %v472 = vsel %vm460, %v404, %v404
        %v473 = vsel %vm462, %v404, %v472
        %v474 = vsel %vm464, %v404, %v473
        %v475 = vsel %vm466, %v404, %v474
        %v476 = vsel %vm468, %v404, %v475
        %v477 = vsel %vm470, %v404, %v476
        %v478 = vsel %vm460, %v413, %v413
        %v479 = vsel %vm462, %v413, %v478
        %v480 = vsel %vm464, %v413, %v479
        %v481 = vsel %vm466, %v413, %v480
        %v482 = vsel %vm468, %v413, %v481
        %v483 = vsel %vm470, %v413, %v482
        %v484 = vsel %vm460, %v422, %v422
        %v485 = vsel %vm462, %v422, %v484
        %v486 = vsel %vm464, %v422, %v485
        %v487 = vsel %vm466, %v422, %v486
        %v488 = vsel %vm468, %v422, %v487
        %v489 = vsel %vm470, %v422, %v488
        %v490 = vsel %vm460, %v431, %v431
        %v491 = vsel %vm462, %v431, %v490
        %v492 = vsel %vm464, %v431, %v491
        %v493 = vsel %vm466, %v431, %v492
        %v494 = vsel %vm468, %v431, %v493
        %v495 = vsel %vm470, %v431, %v494
        %v496 = vsel %vm460, %v440, %v440
        %v497 = vsel %vm462, %v440, %v496
        %v498 = vsel %vm464, %v440, %v497
        %v499 = vsel %vm466, %v440, %v498
        %v500 = vsel %vm468, %v440, %v499
        %v501 = vsel %vm470, %v440, %v500
        %v502 = vsel %vm460, %v449, %v449
        %v503 = vsel %vm462, %v449, %v502
        %v504 = vsel %vm464, %v449, %v503
        %v505 = vsel %vm466, %v449, %v504
        %v506 = vsel %vm468, %v449, %v505
        %v507 = vsel %vm470, %v449, %v506
        %v508 = vsel %vm460, %v458, %v458
        %v509 = vsel %vm462, %v458, %v508
        %v510 = vsel %vm464, %v458, %v509
        %v511 = vsel %vm466, %v458, %v510
        %v512 = vsel %vm468, %v458, %v511
        %v513 = vsel %vm470, %v458, %v512
        %v522 = vmul.f32 %v259, %v471
        %v523 = vmul.f32 %v260, %v471
        %v524 = vmul.f32 %v261, %v477
        %v525 = vmul.f32 %v262, %v477
        %v526 = vmul.f32 %v263, %v483
        %v527 = vmul.f32 %v264, %v483
        %v528 = vmul.f32 %v265, %v489
        %v529 = vmul.f32 %v266, %v489
        %v530 = vmul.f32 %v267, %v495
        %v531 = vmul.f32 %v268, %v495
        %v532 = vmul.f32 %v269, %v501
        %v533 = vmul.f32 %v270, %v501
        %v534 = vmul.f32 %v271, %v507
        %v535 = vmul.f32 %v272, %v507
        %v536 = vmul.f32 %v273, %v513
        %v537 = vmul.f32 %v274, %v513
        %v538 = vsel %vm281, %v522, 0.0
        %539 = vadd.xlane.f32.xlu0 %v538
        %v540 = vpop.xlane.xlu0 %539
        %v541 = vsel %vm281, %v523, 0.0
        %542 = vadd.xlane.f32.xlu0 %v541
        %v543 = vpop.xlane.xlu0 %542
        %v544 = vsel %vm281, %v524, 0.0
        %545 = vadd.xlane.f32.xlu0 %v544
        %v546 = vpop.xlane.xlu0 %545
        %v547 = vsel %vm281, %v525, 0.0
        %548 = vadd.xlane.f32.xlu0 %v547
        %v549 = vpop.xlane.xlu0 %548
        %v550 = vsel %vm281, %v526, 0.0
        %551 = vadd.xlane.f32.xlu0 %v550
        %v552 = vpop.xlane.xlu0 %551
        %v553 = vsel %vm281, %v527, 0.0
        %554 = vadd.xlane.f32.xlu0 %v553
        %v555 = vpop.xlane.xlu0 %554
        %v556 = vsel %vm281, %v528, 0.0
        %557 = vadd.xlane.f32.xlu0 %v556
        %v558 = vpop.xlane.xlu0 %557
        %v559 = vsel %vm281, %v529, 0.0
        %560 = vadd.xlane.f32.xlu0 %v559
        %v561 = vpop.xlane.xlu0 %560
        %v562 = vsel %vm281, %v530, 0.0
        %563 = vadd.xlane.f32.xlu0 %v562
        %v564 = vpop.xlane.xlu0 %563
        %v565 = vsel %vm281, %v531, 0.0
        %566 = vadd.xlane.f32.xlu0 %v565
        %v567 = vpop.xlane.xlu0 %566
        %v568 = vsel %vm281, %v532, 0.0
        %569 = vadd.xlane.f32.xlu0 %v568
        %v570 = vpop.xlane.xlu0 %569
        %v571 = vsel %vm281, %v533, 0.0
        %572 = vadd.xlane.f32.xlu0 %v571
        %v573 = vpop.xlane.xlu0 %572
        %v574 = vsel %vm281, %v534, 0.0
        %575 = vadd.xlane.f32.xlu0 %v574
        %v576 = vpop.xlane.xlu0 %575
        %v577 = vsel %vm281, %v535, 0.0
        %578 = vadd.xlane.f32.xlu0 %v577
        %v579 = vpop.xlane.xlu0 %578
        %v580 = vsel %vm281, %v536, 0.0
        %581 = vadd.xlane.f32.xlu0 %v580
        %v582 = vpop.xlane.xlu0 %581
        %v583 = vsel %vm281, %v537, 0.0
        %584 = vadd.xlane.f32.xlu0 %v583
        %v585 = vpop.xlane.xlu0 %584
        %v586 = vld [vmem:[#allocation6 + $0x2] sm:$0x1]
        %v587 = vlaneseq
        %v588 = vshrl.u32 %v587, 7
        %v589 = vsub.s32 0, %v588
        %v590 = vrot.slane %v586, %v589
        %v591 = vmul.f32 %v540, %v590
        %v592 = vmul.f32 %v543, %v590
        %v593 = vmul.f32 %v546, %v590
        %v594 = vmul.f32 %v549, %v590
        %v595 = vmul.f32 %v552, %v590
        %v596 = vmul.f32 %v555, %v590
        %v597 = vmul.f32 %v558, %v590
        %v598 = vmul.f32 %v561, %v590
        %v599 = vmul.f32 %v564, %v590
        %v600 = vmul.f32 %v567, %v590
        %v601 = vmul.f32 %v570, %v590
        %v602 = vmul.f32 %v573, %v590
        %v603 = vmul.f32 %v576, %v590
        %v604 = vmul.f32 %v579, %v590
        %v605 = vmul.f32 %v582, %v590
        %v606 = vmul.f32 %v585, %v590
        %v607 = vadd.f32 %v351, %v591
        %v608 = vadd.f32 %v352, %v592
        %v609 = vadd.f32 %v353, %v593
        %v610 = vadd.f32 %v354, %v594
        %v611 = vadd.f32 %v355, %v595
        %v612 = vadd.f32 %v356, %v596
        %v613 = vadd.f32 %v357, %v597
        %v614 = vadd.f32 %v358, %v598
        %v615 = vadd.f32 %v359, %v599
        %v616 = vadd.f32 %v360, %v600
        %v617 = vadd.f32 %v361, %v601
        %v618 = vadd.f32 %v362, %v602
        %v619 = vadd.f32 %v363, %v603
        %v620 = vadd.f32 %v364, %v604
        %v621 = vadd.f32 %v365, %v605
        %v622 = vadd.f32 %v366, %v606
        %v623 = vld [vmem:[%s2] sm:$0x1]
        %v625 = vlaneseq
        %v626 = vshrl.u32 %v625, 7
        %v627 = vsub.s32 0, %v626
        %v628 = vrot.slane %v623, %v627
        %v630 = vadd.f32 %v607, %v628
        %v631 = vadd.f32 %v608, %v628
        %v632 = vadd.f32 %v609, %v628
        %v633 = vadd.f32 %v610, %v628
        %v634 = vadd.f32 %v611, %v628
        %v635 = vadd.f32 %v612, %v628
        %v636 = vadd.f32 %v613, %v628
        %v637 = vadd.f32 %v614, %v628
        %v638 = vadd.f32 %v615, %v628
        %v639 = vadd.f32 %v616, %v628
        %v640 = vadd.f32 %v617, %v628
        %v641 = vadd.f32 %v618, %v628
        %v642 = vadd.f32 %v619, %v628
        %v643 = vadd.f32 %v620, %v628
        %v644 = vadd.f32 %v621, %v628
        %v645 = vadd.f32 %v622, %v628
        %v646 = vmax.f32 %v630, 0.0
        %v647 = vmax.f32 %v631, 0.0
        %v648 = vmax.f32 %v632, 0.0
        %v649 = vmax.f32 %v633, 0.0
        %v650 = vmax.f32 %v634, 0.0
        %v651 = vmax.f32 %v635, 0.0
        %v652 = vmax.f32 %v636, 0.0
        %v653 = vmax.f32 %v637, 0.0
        %v654 = vmax.f32 %v638, 0.0
        %v655 = vmax.f32 %v639, 0.0
        %v656 = vmax.f32 %v640, 0.0
        %v657 = vmax.f32 %v641, 0.0
        %v658 = vmax.f32 %v642, 0.0
        %v659 = vmax.f32 %v643, 0.0
        %v660 = vmax.f32 %v644, 0.0
        %v661 = vmax.f32 %v645, 0.0
        %v662 = vld [vmem:[%s3] sm:$0x1]
        %v663 = vlaneseq
        %v664 = vshrl.u32 %v663, 7
        %v665 = vsub.s32 0, %v664
        %v666 = vrot.slane %v662, %v665
        %v667 = vmul.f32 %v646, %v666
        %v668 = vmul.f32 %v647, %v666
        %v669 = vmul.f32 %v648, %v666
        %v670 = vmul.f32 %v649, %v666
        %v671 = vmul.f32 %v650, %v666
        %v672 = vmul.f32 %v651, %v666
        %v673 = vmul.f32 %v652, %v666
        %v674 = vmul.f32 %v653, %v666
        %v675 = vmul.f32 %v654, %v666
        %v676 = vmul.f32 %v655, %v666
        %v677 = vmul.f32 %v656, %v666
        %v678 = vmul.f32 %v657, %v666
        %v679 = vmul.f32 %v658, %v666
        %v680 = vmul.f32 %v659, %v666
        %v681 = vmul.f32 %v660, %v666
        %v682 = vmul.f32 %v661, %v666
        %v683 = vadd.f32 %v667, 0.0
        %v684 = vadd.f32 %v668, 0.0
        %v685 = vadd.f32 %v669, 0.0
        %v686 = vadd.f32 %v670, 0.0
        %v687 = vadd.f32 %v671, 0.0
        %v688 = vadd.f32 %v672, 0.0
        %v689 = vadd.f32 %v673, 0.0
        %v690 = vadd.f32 %v674, 0.0
        %v691 = vadd.f32 %v675, 0.0
        %v692 = vadd.f32 %v676, 0.0
        %v693 = vadd.f32 %v677, 0.0
        %v694 = vadd.f32 %v678, 0.0
        %v695 = vadd.f32 %v679, 0.0
        %v696 = vadd.f32 %v680, 0.0
        %v697 = vadd.f32 %v681, 0.0
        %v698 = vadd.f32 %v682, 0.0
        %v700 = vsel %vm281, %v259, 0
        %v703 = vsel %vm281, %v260, 0
        %705 = vmatprep.subr.mxu0 0.0
        %706 = vmatpush1.msra.mxu0 0.0
        %707 = vmatprep.subr.mxu0 0.0
        %708 = vmatpush1.msra.mxu0 0.0
        %709 = vmatprep.subr.mxu0 0.0
        %710 = vmatpush1.msra.mxu0 0.0
        %711 = vmatprep.subr.mxu0 0.0
        %712 = vmatpush1.msra.mxu0 0.0
        %713 = vmatprep.subr.mxu0 0.0
        %714 = vmatpush1.msra.mxu0 0.0
        %715 = vmatprep.subr.mxu0 0.0
        %716 = vmatpush1.msra.mxu0 0.0
        %717 = vmatprep.subr.mxu0 0.0
        %718 = vmatpush1.msra.mxu0 0.0
        %719 = vmatprep.subr.mxu0 0.0
        %720 = vmatpush1.msra.mxu0 0.0
        %721 = vmatprep.subr.mxu0 0.0
        %722 = vmatpush1.msra.mxu0 0.0
        %723 = vmatprep.subr.mxu0 0.0
        %724 = vmatpush1.msra.mxu0 0.0
        %725 = vmatprep.subr.mxu0 0.0
        %726 = vmatpush1.msra.mxu0 0.0
        %727 = vmatprep.subr.mxu0 0.0
        %728 = vmatpush1.msra.mxu0 0.0
        %729 = vmatprep.subr.mxu0 0.0
        %730 = vmatpush1.msra.mxu0 0.0
        %731 = vmatprep.subr.mxu0 0.0
        %732 = vmatpush1.msra.mxu0 0.0
        %733 = vmatprep.subr.mxu0 0.0
        %734 = vmatpush1.msra.mxu0 %v647
        %735 = vmatprep.subr.mxu0 0.0
        %736 = vmatpush1.msra.mxu0 %v646
        %737 = vmatprep.subr.mxu0 0.0
        %738 = vmatpush2.msra.mxu0 0.0
        %739 = vmatprep.subr.mxu0 0.0
        %740 = vmatpush2.msra.mxu0 0.0
        %741 = vmatprep.subr.mxu0 0.0
        %742 = vmatpush2.msra.mxu0 0.0
        %743 = vmatprep.subr.mxu0 0.0
        %744 = vmatpush2.msra.mxu0 0.0
        %745 = vmatprep.subr.mxu0 0.0
        %746 = vmatpush2.msra.mxu0 0.0
        %747 = vmatprep.subr.mxu0 0.0
        %748 = vmatpush2.msra.mxu0 0.0
        %749 = vmatprep.subr.mxu0 0.0
        %750 = vmatpush2.msra.mxu0 0.0
        %751 = vmatprep.subr.mxu0 0.0
        %752 = vmatpush2.msra.mxu0 0.0
        %753 = vmatprep.subr.mxu0 0.0
        %754 = vmatpush2.msra.mxu0 0.0
        %755 = vmatprep.subr.mxu0 0.0
        %756 = vmatpush2.msra.mxu0 0.0
        %757 = vmatprep.subr.mxu0 0.0
        %758 = vmatpush2.msra.mxu0 0.0
        %759 = vmatprep.subr.mxu0 0.0
        %760 = vmatpush2.msra.mxu0 0.0
        %761 = vmatprep.subr.mxu0 0.0
        %762 = vmatpush2.msra.mxu0 0.0
        %763 = vmatprep.subr.mxu0 0.0
        %764 = vmatpush2.msra.mxu0 0.0
        %765 = vmatprep.subr.mxu0 0.0
        %766 = vmatpush2.msra.mxu0 0.0
        %767 = vmatprep.subr.mxu0 0.0
        %768 = vmatpush2.msra.mxu0 0.0
        %769 = vmatprep.mubr.f32.mxu0 0.0
        %770 = vmatmul.mubr.f32.gmra.mxu0 %v700
        %v771 = vpop.f32.mrf.mxu0
        %v772 = vadd.f32 0.0, %v771
        %v773 = vpop.f32.mrf.mxu0
        %774 = vmatprep.mubr.f32.mxu0 0.0
        %775 = vmatmul.mubr.f32.gmra.mxu0 %v703
        %v776 = vpop.f32.mrf.mxu0
        %v777 = vadd.f32 0.0, %v776
        %v778 = vpop.f32.mrf.mxu0
        %779 = vdwg.mxu0
        %v781 = vsel %vm281, %v261, 0
        %v784 = vsel %vm281, %v262, 0
        %786 = vmatprep.subr.mxu0 0.0
        %787 = vmatpush1.msra.mxu0 0.0
        %788 = vmatprep.subr.mxu0 0.0
        %789 = vmatpush1.msra.mxu0 0.0
        %790 = vmatprep.subr.mxu0 0.0
        %791 = vmatpush1.msra.mxu0 0.0
        %792 = vmatprep.subr.mxu0 0.0
        %793 = vmatpush1.msra.mxu0 0.0
        %794 = vmatprep.subr.mxu0 0.0
        %795 = vmatpush1.msra.mxu0 0.0
        %796 = vmatprep.subr.mxu0 0.0
        %797 = vmatpush1.msra.mxu0 0.0
        %798 = vmatprep.subr.mxu0 0.0
        %799 = vmatpush1.msra.mxu0 0.0
        %800 = vmatprep.subr.mxu0 0.0
        %801 = vmatpush1.msra.mxu0 0.0
        %802 = vmatprep.subr.mxu0 0.0
        %803 = vmatpush1.msra.mxu0 0.0
        %804 = vmatprep.subr.mxu0 0.0
        %805 = vmatpush1.msra.mxu0 0.0
        %806 = vmatprep.subr.mxu0 0.0
        %807 = vmatpush1.msra.mxu0 0.0
        %808 = vmatprep.subr.mxu0 0.0
        %809 = vmatpush1.msra.mxu0 0.0
        %810 = vmatprep.subr.mxu0 0.0
        %811 = vmatpush1.msra.mxu0 0.0
        %812 = vmatprep.subr.mxu0 0.0
        %813 = vmatpush1.msra.mxu0 0.0
        %814 = vmatprep.subr.mxu0 0.0
        %815 = vmatpush1.msra.mxu0 %v649
        %816 = vmatprep.subr.mxu0 0.0
        %817 = vmatpush1.msra.mxu0 %v648
        %818 = vmatprep.subr.mxu0 0.0
        %819 = vmatpush2.msra.mxu0 0.0
        %820 = vmatprep.subr.mxu0 0.0
        %821 = vmatpush2.msra.mxu0 0.0
        %822 = vmatprep.subr.mxu0 0.0
        %823 = vmatpush2.msra.mxu0 0.0
        %824 = vmatprep.subr.mxu0 0.0
        %825 = vmatpush2.msra.mxu0 0.0
        %826 = vmatprep.subr.mxu0 0.0
        %827 = vmatpush2.msra.mxu0 0.0
        %828 = vmatprep.subr.mxu0 0.0
        %829 = vmatpush2.msra.mxu0 0.0
        %830 = vmatprep.subr.mxu0 0.0
        %831 = vmatpush2.msra.mxu0 0.0
        %832 = vmatprep.subr.mxu0 0.0
        %833 = vmatpush2.msra.mxu0 0.0
        %834 = vmatprep.subr.mxu0 0.0
        %835 = vmatpush2.msra.mxu0 0.0
        %836 = vmatprep.subr.mxu0 0.0
        %837 = vmatpush2.msra.mxu0 0.0
        %838 = vmatprep.subr.mxu0 0.0
        %839 = vmatpush2.msra.mxu0 0.0
        %840 = vmatprep.subr.mxu0 0.0
        %841 = vmatpush2.msra.mxu0 0.0
        %842 = vmatprep.subr.mxu0 0.0
        %843 = vmatpush2.msra.mxu0 0.0
        %844 = vmatprep.subr.mxu0 0.0
        %845 = vmatpush2.msra.mxu0 0.0
        %846 = vmatprep.subr.mxu0 0.0
        %847 = vmatpush2.msra.mxu0 0.0
        %848 = vmatprep.subr.mxu0 0.0
        %849 = vmatpush2.msra.mxu0 0.0
        %850 = vmatprep.mubr.f32.mxu0 0.0
        %851 = vmatmul.mubr.f32.gmra.mxu0 %v781
        %v852 = vpop.f32.mrf.mxu0
        %v853 = vadd.f32 0.0, %v852
        %v854 = vpop.f32.mrf.mxu0
        %855 = vmatprep.mubr.f32.mxu0 0.0
        %856 = vmatmul.mubr.f32.gmra.mxu0 %v784
        %v857 = vpop.f32.mrf.mxu0
        %v858 = vadd.f32 0.0, %v857
        %v859 = vpop.f32.mrf.mxu0
        %860 = vdwg.mxu0
        %v862 = vsel %vm281, %v263, 0
        %v865 = vsel %vm281, %v264, 0
        %867 = vmatprep.subr.mxu0 0.0
        %868 = vmatpush1.msra.mxu0 0.0
        %869 = vmatprep.subr.mxu0 0.0
        %870 = vmatpush1.msra.mxu0 0.0
        %871 = vmatprep.subr.mxu0 0.0
        %872 = vmatpush1.msra.mxu0 0.0
        %873 = vmatprep.subr.mxu0 0.0
        %874 = vmatpush1.msra.mxu0 0.0
        %875 = vmatprep.subr.mxu0 0.0
        %876 = vmatpush1.msra.mxu0 0.0
        %877 = vmatprep.subr.mxu0 0.0
        %878 = vmatpush1.msra.mxu0 0.0
        %879 = vmatprep.subr.mxu0 0.0
        %880 = vmatpush1.msra.mxu0 0.0
        %881 = vmatprep.subr.mxu0 0.0
        %882 = vmatpush1.msra.mxu0 0.0
        %883 = vmatprep.subr.mxu0 0.0
        %884 = vmatpush1.msra.mxu0 0.0
        %885 = vmatprep.subr.mxu0 0.0
        %886 = vmatpush1.msra.mxu0 0.0
        %887 = vmatprep.subr.mxu0 0.0
        %888 = vmatpush1.msra.mxu0 0.0
        %889 = vmatprep.subr.mxu0 0.0
        %890 = vmatpush1.msra.mxu0 0.0
        %891 = vmatprep.subr.mxu0 0.0
        %892 = vmatpush1.msra.mxu0 0.0
        %893 = vmatprep.subr.mxu0 0.0
        %894 = vmatpush1.msra.mxu0 0.0
        %895 = vmatprep.subr.mxu0 0.0
        %896 = vmatpush1.msra.mxu0 %v651
        %897 = vmatprep.subr.mxu0 0.0
        %898 = vmatpush1.msra.mxu0 %v650
        %899 = vmatprep.subr.mxu0 0.0
        %900 = vmatpush2.msra.mxu0 0.0
        %901 = vmatprep.subr.mxu0 0.0
        %902 = vmatpush2.msra.mxu0 0.0
        %903 = vmatprep.subr.mxu0 0.0
        %904 = vmatpush2.msra.mxu0 0.0
        %905 = vmatprep.subr.mxu0 0.0
        %906 = vmatpush2.msra.mxu0 0.0
        %907 = vmatprep.subr.mxu0 0.0
        %908 = vmatpush2.msra.mxu0 0.0
        %909 = vmatprep.subr.mxu0 0.0
        %910 = vmatpush2.msra.mxu0 0.0
        %911 = vmatprep.subr.mxu0 0.0
        %912 = vmatpush2.msra.mxu0 0.0
        %913 = vmatprep.subr.mxu0 0.0
        %914 = vmatpush2.msra.mxu0 0.0
        %915 = vmatprep.subr.mxu0 0.0
        %916 = vmatpush2.msra.mxu0 0.0
        %917 = vmatprep.subr.mxu0 0.0
        %918 = vmatpush2.msra.mxu0 0.0
        %919 = vmatprep.subr.mxu0 0.0
        %920 = vmatpush2.msra.mxu0 0.0
        %921 = vmatprep.subr.mxu0 0.0
        %922 = vmatpush2.msra.mxu0 0.0
        %923 = vmatprep.subr.mxu0 0.0
        %924 = vmatpush2.msra.mxu0 0.0
        %925 = vmatprep.subr.mxu0 0.0
        %926 = vmatpush2.msra.mxu0 0.0
        %927 = vmatprep.subr.mxu0 0.0
        %928 = vmatpush2.msra.mxu0 0.0
        %929 = vmatprep.subr.mxu0 0.0
        %930 = vmatpush2.msra.mxu0 0.0
        %931 = vmatprep.mubr.f32.mxu0 0.0
        %932 = vmatmul.mubr.f32.gmra.mxu0 %v862
        %v933 = vpop.f32.mrf.mxu0
        %v934 = vadd.f32 0.0, %v933
        %v935 = vpop.f32.mrf.mxu0
        %936 = vmatprep.mubr.f32.mxu0 0.0
        %937 = vmatmul.mubr.f32.gmra.mxu0 %v865
        %v938 = vpop.f32.mrf.mxu0
        %v939 = vadd.f32 0.0, %v938
        %v940 = vpop.f32.mrf.mxu0
        %941 = vdwg.mxu0
        %v943 = vsel %vm281, %v265, 0
        %v946 = vsel %vm281, %v266, 0
        %948 = vmatprep.subr.mxu0 0.0
        %949 = vmatpush1.msra.mxu0 0.0
        %950 = vmatprep.subr.mxu0 0.0
        %951 = vmatpush1.msra.mxu0 0.0
        %952 = vmatprep.subr.mxu0 0.0
        %953 = vmatpush1.msra.mxu0 0.0
        %954 = vmatprep.subr.mxu0 0.0
        %955 = vmatpush1.msra.mxu0 0.0
        %956 = vmatprep.subr.mxu0 0.0
        %957 = vmatpush1.msra.mxu0 0.0
        %958 = vmatprep.subr.mxu0 0.0
        %959 = vmatpush1.msra.mxu0 0.0
        %960 = vmatprep.subr.mxu0 0.0
        %961 = vmatpush1.msra.mxu0 0.0
        %962 = vmatprep.subr.mxu0 0.0
        %963 = vmatpush1.msra.mxu0 0.0
        %964 = vmatprep.subr.mxu0 0.0
        %965 = vmatpush1.msra.mxu0 0.0
        %966 = vmatprep.subr.mxu0 0.0
        %967 = vmatpush1.msra.mxu0 0.0
        %968 = vmatprep.subr.mxu0 0.0
        %969 = vmatpush1.msra.mxu0 0.0
        %970 = vmatprep.subr.mxu0 0.0
        %971 = vmatpush1.msra.mxu0 0.0
        %972 = vmatprep.subr.mxu0 0.0
        %973 = vmatpush1.msra.mxu0 0.0
        %974 = vmatprep.subr.mxu0 0.0
        %975 = vmatpush1.msra.mxu0 0.0
        %976 = vmatprep.subr.mxu0 0.0
        %977 = vmatpush1.msra.mxu0 %v653
        %978 = vmatprep.subr.mxu0 0.0
        %979 = vmatpush1.msra.mxu0 %v652
        %980 = vmatprep.subr.mxu0 0.0
        %981 = vmatpush2.msra.mxu0 0.0
        %982 = vmatprep.subr.mxu0 0.0
        %983 = vmatpush2.msra.mxu0 0.0
        %984 = vmatprep.subr.mxu0 0.0
        %985 = vmatpush2.msra.mxu0 0.0
        %986 = vmatprep.subr.mxu0 0.0
        %987 = vmatpush2.msra.mxu0 0.0
        %988 = vmatprep.subr.mxu0 0.0
        %989 = vmatpush2.msra.mxu0 0.0
        %990 = vmatprep.subr.mxu0 0.0
        %991 = vmatpush2.msra.mxu0 0.0
        %992 = vmatprep.subr.mxu0 0.0
        %993 = vmatpush2.msra.mxu0 0.0
        %994 = vmatprep.subr.mxu0 0.0
        %995 = vmatpush2.msra.mxu0 0.0
        %996 = vmatprep.subr.mxu0 0.0
        %997 = vmatpush2.msra.mxu0 0.0
        %998 = vmatprep.subr.mxu0 0.0
        %999 = vmatpush2.msra.mxu0 0.0
        %1000 = vmatprep.subr.mxu0 0.0
        %1001 = vmatpush2.msra.mxu0 0.0
        %1002 = vmatprep.subr.mxu0 0.0
        %1003 = vmatpush2.msra.mxu0 0.0
        %1004 = vmatprep.subr.mxu0 0.0
        %1005 = vmatpush2.msra.mxu0 0.0
        %1006 = vmatprep.subr.mxu0 0.0
        %1007 = vmatpush2.msra.mxu0 0.0
        %1008 = vmatprep.subr.mxu0 0.0
        %1009 = vmatpush2.msra.mxu0 0.0
        %1010 = vmatprep.subr.mxu0 0.0
        %1011 = vmatpush2.msra.mxu0 0.0
        %1012 = vmatprep.mubr.f32.mxu0 0.0
        %1013 = vmatmul.mubr.f32.gmra.mxu0 %v943
        %v1014 = vpop.f32.mrf.mxu0
        %v1015 = vadd.f32 0.0, %v1014
        %v1016 = vpop.f32.mrf.mxu0
        %1017 = vmatprep.mubr.f32.mxu0 0.0
        %1018 = vmatmul.mubr.f32.gmra.mxu0 %v946
        %v1019 = vpop.f32.mrf.mxu0
        %v1020 = vadd.f32 0.0, %v1019
        %v1021 = vpop.f32.mrf.mxu0
        %1022 = vdwg.mxu0
        %v1024 = vsel %vm281, %v267, 0
        %v1027 = vsel %vm281, %v268, 0
        %1029 = vmatprep.subr.mxu0 0.0
        %1030 = vmatpush1.msra.mxu0 0.0
        %1031 = vmatprep.subr.mxu0 0.0
        %1032 = vmatpush1.msra.mxu0 0.0
        %1033 = vmatprep.subr.mxu0 0.0
        %1034 = vmatpush1.msra.mxu0 0.0
        %1035 = vmatprep.subr.mxu0 0.0
        %1036 = vmatpush1.msra.mxu0 0.0
        %1037 = vmatprep.subr.mxu0 0.0
        %1038 = vmatpush1.msra.mxu0 0.0
        %1039 = vmatprep.subr.mxu0 0.0
        %1040 = vmatpush1.msra.mxu0 0.0
        %1041 = vmatprep.subr.mxu0 0.0
        %1042 = vmatpush1.msra.mxu0 0.0
        %1043 = vmatprep.subr.mxu0 0.0
        %1044 = vmatpush1.msra.mxu0 0.0
        %1045 = vmatprep.subr.mxu0 0.0
        %1046 = vmatpush1.msra.mxu0 0.0
        %1047 = vmatprep.subr.mxu0 0.0
        %1048 = vmatpush1.msra.mxu0 0.0
        %1049 = vmatprep.subr.mxu0 0.0
        %1050 = vmatpush1.msra.mxu0 0.0
        %1051 = vmatprep.subr.mxu0 0.0
        %1052 = vmatpush1.msra.mxu0 0.0
        %1053 = vmatprep.subr.mxu0 0.0
        %1054 = vmatpush1.msra.mxu0 0.0
        %1055 = vmatprep.subr.mxu0 0.0
        %1056 = vmatpush1.msra.mxu0 0.0
        %1057 = vmatprep.subr.mxu0 0.0
        %1058 = vmatpush1.msra.mxu0 %v655
        %1059 = vmatprep.subr.mxu0 0.0
        %1060 = vmatpush1.msra.mxu0 %v654
        %1061 = vmatprep.subr.mxu0 0.0
        %1062 = vmatpush2.msra.mxu0 0.0
        %1063 = vmatprep.subr.mxu0 0.0
        %1064 = vmatpush2.msra.mxu0 0.0
        %1065 = vmatprep.subr.mxu0 0.0
        %1066 = vmatpush2.msra.mxu0 0.0
        %1067 = vmatprep.subr.mxu0 0.0
        %1068 = vmatpush2.msra.mxu0 0.0
        %1069 = vmatprep.subr.mxu0 0.0
        %1070 = vmatpush2.msra.mxu0 0.0
        %1071 = vmatprep.subr.mxu0 0.0
        %1072 = vmatpush2.msra.mxu0 0.0
        %1073 = vmatprep.subr.mxu0 0.0
        %1074 = vmatpush2.msra.mxu0 0.0
        %1075 = vmatprep.subr.mxu0 0.0
        %1076 = vmatpush2.msra.mxu0 0.0
        %1077 = vmatprep.subr.mxu0 0.0
        %1078 = vmatpush2.msra.mxu0 0.0
        %1079 = vmatprep.subr.mxu0 0.0
        %1080 = vmatpush2.msra.mxu0 0.0
        %1081 = vmatprep.subr.mxu0 0.0
        %1082 = vmatpush2.msra.mxu0 0.0
        %1083 = vmatprep.subr.mxu0 0.0
        %1084 = vmatpush2.msra.mxu0 0.0
        %1085 = vmatprep.subr.mxu0 0.0
        %1086 = vmatpush2.msra.mxu0 0.0
        %1087 = vmatprep.subr.mxu0 0.0
        %1088 = vmatpush2.msra.mxu0 0.0
        %1089 = vmatprep.subr.mxu0 0.0
        %1090 = vmatpush2.msra.mxu0 0.0
        %1091 = vmatprep.subr.mxu0 0.0
        %1092 = vmatpush2.msra.mxu0 0.0
        %1093 = vmatprep.mubr.f32.mxu0 0.0
        %1094 = vmatmul.mubr.f32.gmra.mxu0 %v1024
        %v1095 = vpop.f32.mrf.mxu0
        %v1096 = vadd.f32 0.0, %v1095
        %v1097 = vpop.f32.mrf.mxu0
        %1098 = vmatprep.mubr.f32.mxu0 0.0
        %1099 = vmatmul.mubr.f32.gmra.mxu0 %v1027
        %v1100 = vpop.f32.mrf.mxu0
        %v1101 = vadd.f32 0.0, %v1100
        %v1102 = vpop.f32.mrf.mxu0
        %1103 = vdwg.mxu0
        %v1105 = vsel %vm281, %v269, 0
        %v1108 = vsel %vm281, %v270, 0
        %1110 = vmatprep.subr.mxu0 0.0
        %1111 = vmatpush1.msra.mxu0 0.0
        %1112 = vmatprep.subr.mxu0 0.0
        %1113 = vmatpush1.msra.mxu0 0.0
        %1114 = vmatprep.subr.mxu0 0.0
        %1115 = vmatpush1.msra.mxu0 0.0
        %1116 = vmatprep.subr.mxu0 0.0
        %1117 = vmatpush1.msra.mxu0 0.0
        %1118 = vmatprep.subr.mxu0 0.0
        %1119 = vmatpush1.msra.mxu0 0.0
        %1120 = vmatprep.subr.mxu0 0.0
        %1121 = vmatpush1.msra.mxu0 0.0
        %1122 = vmatprep.subr.mxu0 0.0
        %1123 = vmatpush1.msra.mxu0 0.0
        %1124 = vmatprep.subr.mxu0 0.0
        %1125 = vmatpush1.msra.mxu0 0.0
        %1126 = vmatprep.subr.mxu0 0.0
        %1127 = vmatpush1.msra.mxu0 0.0
        %1128 = vmatprep.subr.mxu0 0.0
        %1129 = vmatpush1.msra.mxu0 0.0
        %1130 = vmatprep.subr.mxu0 0.0
        %1131 = vmatpush1.msra.mxu0 0.0
        %1132 = vmatprep.subr.mxu0 0.0
        %1133 = vmatpush1.msra.mxu0 0.0
        %1134 = vmatprep.subr.mxu0 0.0
        %1135 = vmatpush1.msra.mxu0 0.0
        %1136 = vmatprep.subr.mxu0 0.0
        %1137 = vmatpush1.msra.mxu0 0.0
        %1138 = vmatprep.subr.mxu0 0.0
        %1139 = vmatpush1.msra.mxu0 %v657
        %1140 = vmatprep.subr.mxu0 0.0
        %1141 = vmatpush1.msra.mxu0 %v656
        %1142 = vmatprep.subr.mxu0 0.0
        %1143 = vmatpush2.msra.mxu0 0.0
        %1144 = vmatprep.subr.mxu0 0.0
        %1145 = vmatpush2.msra.mxu0 0.0
        %1146 = vmatprep.subr.mxu0 0.0
        %1147 = vmatpush2.msra.mxu0 0.0
        %1148 = vmatprep.subr.mxu0 0.0
        %1149 = vmatpush2.msra.mxu0 0.0
        %1150 = vmatprep.subr.mxu0 0.0
        %1151 = vmatpush2.msra.mxu0 0.0
        %1152 = vmatprep.subr.mxu0 0.0
        %1153 = vmatpush2.msra.mxu0 0.0
        %1154 = vmatprep.subr.mxu0 0.0
        %1155 = vmatpush2.msra.mxu0 0.0
        %1156 = vmatprep.subr.mxu0 0.0
        %1157 = vmatpush2.msra.mxu0 0.0
        %1158 = vmatprep.subr.mxu0 0.0
        %1159 = vmatpush2.msra.mxu0 0.0
        %1160 = vmatprep.subr.mxu0 0.0
        %1161 = vmatpush2.msra.mxu0 0.0
        %1162 = vmatprep.subr.mxu0 0.0
        %1163 = vmatpush2.msra.mxu0 0.0
        %1164 = vmatprep.subr.mxu0 0.0
        %1165 = vmatpush2.msra.mxu0 0.0
        %1166 = vmatprep.subr.mxu0 0.0
        %1167 = vmatpush2.msra.mxu0 0.0
        %1168 = vmatprep.subr.mxu0 0.0
        %1169 = vmatpush2.msra.mxu0 0.0
        %1170 = vmatprep.subr.mxu0 0.0
        %1171 = vmatpush2.msra.mxu0 0.0
        %1172 = vmatprep.subr.mxu0 0.0
        %1173 = vmatpush2.msra.mxu0 0.0
        %1174 = vmatprep.mubr.f32.mxu0 0.0
        %1175 = vmatmul.mubr.f32.gmra.mxu0 %v1105
        %v1176 = vpop.f32.mrf.mxu0
        %v1177 = vadd.f32 0.0, %v1176
        %v1178 = vpop.f32.mrf.mxu0
        %1179 = vmatprep.mubr.f32.mxu0 0.0
        %1180 = vmatmul.mubr.f32.gmra.mxu0 %v1108
        %v1181 = vpop.f32.mrf.mxu0
        %v1182 = vadd.f32 0.0, %v1181
        %v1183 = vpop.f32.mrf.mxu0
        %1184 = vdwg.mxu0
        %v1186 = vsel %vm281, %v271, 0
        %v1189 = vsel %vm281, %v272, 0
        %1191 = vmatprep.subr.mxu0 0.0
        %1192 = vmatpush1.msra.mxu0 0.0
        %1193 = vmatprep.subr.mxu0 0.0
        %1194 = vmatpush1.msra.mxu0 0.0
        %1195 = vmatprep.subr.mxu0 0.0
        %1196 = vmatpush1.msra.mxu0 0.0
        %1197 = vmatprep.subr.mxu0 0.0
        %1198 = vmatpush1.msra.mxu0 0.0
        %1199 = vmatprep.subr.mxu0 0.0
        %1200 = vmatpush1.msra.mxu0 0.0
        %1201 = vmatprep.subr.mxu0 0.0
        %1202 = vmatpush1.msra.mxu0 0.0
        %1203 = vmatprep.subr.mxu0 0.0
        %1204 = vmatpush1.msra.mxu0 0.0
        %1205 = vmatprep.subr.mxu0 0.0
        %1206 = vmatpush1.msra.mxu0 0.0
        %1207 = vmatprep.subr.mxu0 0.0
        %1208 = vmatpush1.msra.mxu0 0.0
        %1209 = vmatprep.subr.mxu0 0.0
        %1210 = vmatpush1.msra.mxu0 0.0
        %1211 = vmatprep.subr.mxu0 0.0
        %1212 = vmatpush1.msra.mxu0 0.0
        %1213 = vmatprep.subr.mxu0 0.0
        %1214 = vmatpush1.msra.mxu0 0.0
        %1215 = vmatprep.subr.mxu0 0.0
        %1216 = vmatpush1.msra.mxu0 0.0
        %1217 = vmatprep.subr.mxu0 0.0
        %1218 = vmatpush1.msra.mxu0 0.0
        %1219 = vmatprep.subr.mxu0 0.0
        %1220 = vmatpush1.msra.mxu0 %v659
        %1221 = vmatprep.subr.mxu0 0.0
        %1222 = vmatpush1.msra.mxu0 %v658
        %1223 = vmatprep.subr.mxu0 0.0
        %1224 = vmatpush2.msra.mxu0 0.0
        %1225 = vmatprep.subr.mxu0 0.0
        %1226 = vmatpush2.msra.mxu0 0.0
        %1227 = vmatprep.subr.mxu0 0.0
        %1228 = vmatpush2.msra.mxu0 0.0
        %1229 = vmatprep.subr.mxu0 0.0
        %1230 = vmatpush2.msra.mxu0 0.0
        %1231 = vmatprep.subr.mxu0 0.0
        %1232 = vmatpush2.msra.mxu0 0.0
        %1233 = vmatprep.subr.mxu0 0.0
        %1234 = vmatpush2.msra.mxu0 0.0
        %1235 = vmatprep.subr.mxu0 0.0
        %1236 = vmatpush2.msra.mxu0 0.0
        %1237 = vmatprep.subr.mxu0 0.0
        %1238 = vmatpush2.msra.mxu0 0.0
        %1239 = vmatprep.subr.mxu0 0.0
        %1240 = vmatpush2.msra.mxu0 0.0
        %1241 = vmatprep.subr.mxu0 0.0
        %1242 = vmatpush2.msra.mxu0 0.0
        %1243 = vmatprep.subr.mxu0 0.0
        %1244 = vmatpush2.msra.mxu0 0.0
        %1245 = vmatprep.subr.mxu0 0.0
        %1246 = vmatpush2.msra.mxu0 0.0
        %1247 = vmatprep.subr.mxu0 0.0
        %1248 = vmatpush2.msra.mxu0 0.0
        %1249 = vmatprep.subr.mxu0 0.0
        %1250 = vmatpush2.msra.mxu0 0.0
        %1251 = vmatprep.subr.mxu0 0.0
        %1252 = vmatpush2.msra.mxu0 0.0
        %1253 = vmatprep.subr.mxu0 0.0
        %1254 = vmatpush2.msra.mxu0 0.0
        %1255 = vmatprep.mubr.f32.mxu0 0.0
        %1256 = vmatmul.mubr.f32.gmra.mxu0 %v1186
        %v1257 = vpop.f32.mrf.mxu0
        %v1258 = vadd.f32 0.0, %v1257
        %v1259 = vpop.f32.mrf.mxu0
        %1260 = vmatprep.mubr.f32.mxu0 0.0
        %1261 = vmatmul.mubr.f32.gmra.mxu0 %v1189
        %v1262 = vpop.f32.mrf.mxu0
        %v1263 = vadd.f32 0.0, %v1262
        %v1264 = vpop.f32.mrf.mxu0
        %1265 = vdwg.mxu0
        %v1267 = vsel %vm281, %v273, 0
        %v1270 = vsel %vm281, %v274, 0
        %1272 = vmatprep.subr.mxu0 0.0
        %1273 = vmatpush1.msra.mxu0 0.0
        %1274 = vmatprep.subr.mxu0 0.0
        %1275 = vmatpush1.msra.mxu0 0.0
        %1276 = vmatprep.subr.mxu0 0.0
        %1277 = vmatpush1.msra.mxu0 0.0
        %1278 = vmatprep.subr.mxu0 0.0
        %1279 = vmatpush1.msra.mxu0 0.0
        %1280 = vmatprep.subr.mxu0 0.0
        %1281 = vmatpush1.msra.mxu0 0.0
        %1282 = vmatprep.subr.mxu0 0.0
        %1283 = vmatpush1.msra.mxu0 0.0
        %1284 = vmatprep.subr.mxu0 0.0
        %1285 = vmatpush1.msra.mxu0 0.0
        %1286 = vmatprep.subr.mxu0 0.0
        %1287 = vmatpush1.msra.mxu0 0.0
        %1288 = vmatprep.subr.mxu0 0.0
        %1289 = vmatpush1.msra.mxu0 0.0
        %1290 = vmatprep.subr.mxu0 0.0
        %1291 = vmatpush1.msra.mxu0 0.0
        %1292 = vmatprep.subr.mxu0 0.0
        %1293 = vmatpush1.msra.mxu0 0.0
        %1294 = vmatprep.subr.mxu0 0.0
        %1295 = vmatpush1.msra.mxu0 0.0
        %1296 = vmatprep.subr.mxu0 0.0
        %1297 = vmatpush1.msra.mxu0 0.0
        %1298 = vmatprep.subr.mxu0 0.0
        %1299 = vmatpush1.msra.mxu0 0.0
        %1300 = vmatprep.subr.mxu0 0.0
        %1301 = vmatpush1.msra.mxu0 %v661
        %1302 = vmatprep.subr.mxu0 0.0
        %1303 = vmatpush1.msra.mxu0 %v660
        %1304 = vmatprep.subr.mxu0 0.0
        %1305 = vmatpush2.msra.mxu0 0.0
        %1306 = vmatprep.subr.mxu0 0.0
        %1307 = vmatpush2.msra.mxu0 0.0
        %1308 = vmatprep.subr.mxu0 0.0
        %1309 = vmatpush2.msra.mxu0 0.0
        %1310 = vmatprep.subr.mxu0 0.0
        %1311 = vmatpush2.msra.mxu0 0.0
        %1312 = vmatprep.subr.mxu0 0.0
        %1313 = vmatpush2.msra.mxu0 0.0
        %1314 = vmatprep.subr.mxu0 0.0
        %1315 = vmatpush2.msra.mxu0 0.0
        %1316 = vmatprep.subr.mxu0 0.0
        %1317 = vmatpush2.msra.mxu0 0.0
        %1318 = vmatprep.subr.mxu0 0.0
        %1319 = vmatpush2.msra.mxu0 0.0
        %1320 = vmatprep.subr.mxu0 0.0
        %1321 = vmatpush2.msra.mxu0 0.0
        %1322 = vmatprep.subr.mxu0 0.0
        %1323 = vmatpush2.msra.mxu0 0.0
        %1324 = vmatprep.subr.mxu0 0.0
        %1325 = vmatpush2.msra.mxu0 0.0
        %1326 = vmatprep.subr.mxu0 0.0
        %1327 = vmatpush2.msra.mxu0 0.0
        %1328 = vmatprep.subr.mxu0 0.0
        %1329 = vmatpush2.msra.mxu0 0.0
        %1330 = vmatprep.subr.mxu0 0.0
        %1331 = vmatpush2.msra.mxu0 0.0
        %1332 = vmatprep.subr.mxu0 0.0
        %1333 = vmatpush2.msra.mxu0 0.0
        %1334 = vmatprep.subr.mxu0 0.0
        %1335 = vmatpush2.msra.mxu0 0.0
        %1336 = vmatprep.mubr.f32.mxu0 0.0
        %1337 = vmatmul.mubr.f32.gmra.mxu0 %v1267
        %v1338 = vpop.f32.mrf.mxu0
        %v1339 = vadd.f32 0.0, %v1338
        %v1340 = vpop.f32.mrf.mxu0
        %1341 = vmatprep.mubr.f32.mxu0 0.0
        %1342 = vmatmul.mubr.f32.gmra.mxu0 %v1270
        %v1343 = vpop.f32.mrf.mxu0
        %v1344 = vadd.f32 0.0, %v1343
        %v1345 = vpop.f32.mrf.mxu0
        %1346 = vdwg.mxu0
        %v1347 = vld [vmem:[%s3 + $0x1] sm:$0x1]
        %v1348 = vlaneseq
        %v1349 = vshrl.u32 %v1348, 7
        %v1350 = vsub.s32 0, %v1349
        %v1351 = vrot.slane %v1347, %v1350
        %v1352 = vmul.f32 %v772, %v1351
        %v1353 = vmul.f32 %v777, %v1351
        %v1354 = vmul.f32 %v853, %v1351
        %v1355 = vmul.f32 %v858, %v1351
        %v1356 = vmul.f32 %v934, %v1351
        %v1357 = vmul.f32 %v939, %v1351
        %v1358 = vmul.f32 %v1015, %v1351
        %v1359 = vmul.f32 %v1020, %v1351
        %v1360 = vmul.f32 %v1096, %v1351
        %v1361 = vmul.f32 %v1101, %v1351
        %v1362 = vmul.f32 %v1177, %v1351
        %v1363 = vmul.f32 %v1182, %v1351
        %v1364 = vmul.f32 %v1258, %v1351
        %v1365 = vmul.f32 %v1263, %v1351
        %v1366 = vmul.f32 %v1339, %v1351
        %v1367 = vmul.f32 %v1344, %v1351
        %v1368 = vadd.f32 %v683, %v1352
        %v1369 = vadd.f32 %v684, %v1353
        %v1370 = vadd.f32 %v685, %v1354
        %v1371 = vadd.f32 %v686, %v1355
        %v1372 = vadd.f32 %v687, %v1356
        %v1373 = vadd.f32 %v688, %v1357
        %v1374 = vadd.f32 %v689, %v1358
        %v1375 = vadd.f32 %v690, %v1359
        %v1376 = vadd.f32 %v691, %v1360
        %v1377 = vadd.f32 %v692, %v1361
        %v1378 = vadd.f32 %v693, %v1362
        %v1379 = vadd.f32 %v694, %v1363
        %v1380 = vadd.f32 %v695, %v1364
        %v1381 = vadd.f32 %v696, %v1365
        %v1382 = vadd.f32 %v697, %v1366
        %v1383 = vadd.f32 %v698, %v1367
        %1384 = vmatprep.subr.mxu0 0.0
        %1385 = vmatpush1.msra.mxu0 0.0
        %1386 = vmatprep.subr.mxu0 0.0
        %1387 = vmatpush1.msra.mxu0 0.0
        %1388 = vmatprep.subr.mxu0 0.0
        %1389 = vmatpush1.msra.mxu0 0.0
        %1390 = vmatprep.subr.mxu0 0.0
        %1391 = vmatpush1.msra.mxu0 0.0
        %1392 = vmatprep.subr.mxu0 0.0
        %1393 = vmatpush1.msra.mxu0 0.0
        %1394 = vmatprep.subr.mxu0 0.0
        %1395 = vmatpush1.msra.mxu0 0.0
        %1396 = vmatprep.subr.mxu0 0.0
        %1397 = vmatpush1.msra.mxu0 0.0
        %1398 = vmatprep.subr.mxu0 0.0
        %1399 = vmatpush1.msra.mxu0 0.0
        %1400 = vmatprep.subr.mxu0 0.0
        %1401 = vmatpush1.msra.mxu0 0.0
        %1402 = vmatprep.subr.mxu0 0.0
        %1403 = vmatpush1.msra.mxu0 0.0
        %1404 = vmatprep.subr.mxu0 0.0
        %1405 = vmatpush1.msra.mxu0 0.0
        %1406 = vmatprep.subr.mxu0 0.0
        %1407 = vmatpush1.msra.mxu0 0.0
        %1408 = vmatprep.subr.mxu0 0.0
        %1409 = vmatpush1.msra.mxu0 0.0
        %1410 = vmatprep.subr.mxu0 0.0
        %1411 = vmatpush1.msra.mxu0 0.0
        %1412 = vmatprep.subr.mxu0 0.0
        %1413 = vmatpush1.msra.mxu0 %v777
        %1414 = vmatprep.subr.mxu0 0.0
        %1415 = vmatpush1.msra.mxu0 %v772
        %1416 = vmatprep.subr.mxu0 0.0
        %1417 = vmatpush2.msra.mxu0 0.0
        %1418 = vmatprep.subr.mxu0 0.0
        %1419 = vmatpush2.msra.mxu0 0.0
        %1420 = vmatprep.subr.mxu0 0.0
        %1421 = vmatpush2.msra.mxu0 0.0
        %1422 = vmatprep.subr.mxu0 0.0
        %1423 = vmatpush2.msra.mxu0 0.0
        %1424 = vmatprep.subr.mxu0 0.0
        %1425 = vmatpush2.msra.mxu0 0.0
        %1426 = vmatprep.subr.mxu0 0.0
        %1427 = vmatpush2.msra.mxu0 0.0
        %1428 = vmatprep.subr.mxu0 0.0
        %1429 = vmatpush2.msra.mxu0 0.0
        %1430 = vmatprep.subr.mxu0 0.0
        %1431 = vmatpush2.msra.mxu0 0.0
        %1432 = vmatprep.subr.mxu0 0.0
        %1433 = vmatpush2.msra.mxu0 0.0
        %1434 = vmatprep.subr.mxu0 0.0
        %1435 = vmatpush2.msra.mxu0 0.0
        %1436 = vmatprep.subr.mxu0 0.0
        %1437 = vmatpush2.msra.mxu0 0.0
        %1438 = vmatprep.subr.mxu0 0.0
        %1439 = vmatpush2.msra.mxu0 0.0
        %1440 = vmatprep.subr.mxu0 0.0
        %1441 = vmatpush2.msra.mxu0 0.0
        %1442 = vmatprep.subr.mxu0 0.0
        %1443 = vmatpush2.msra.mxu0 0.0
        %1444 = vmatprep.subr.mxu0 0.0
        %1445 = vmatpush2.msra.mxu0 0.0
        %1446 = vmatprep.subr.mxu0 0.0
        %1447 = vmatpush2.msra.mxu0 0.0
        %1448 = vmatprep.mubr.f32.mxu0 0.0
        %1449 = vmatmul.mubr.f32.gmra.mxu0 %v700
        %v1450 = vpop.f32.mrf.mxu0
        %v1451 = vadd.f32 0.0, %v1450
        %v1452 = vpop.f32.mrf.mxu0
        %1453 = vmatprep.mubr.f32.mxu0 0.0
        %1454 = vmatmul.mubr.f32.gmra.mxu0 %v703
        %v1455 = vpop.f32.mrf.mxu0
        %v1456 = vadd.f32 0.0, %v1455
        %v1457 = vpop.f32.mrf.mxu0
        %1458 = vdwg.mxu0
        %1459 = vmatprep.subr.mxu0 0.0
        %1460 = vmatpush1.msra.mxu0 0.0
        %1461 = vmatprep.subr.mxu0 0.0
        %1462 = vmatpush1.msra.mxu0 0.0
        %1463 = vmatprep.subr.mxu0 0.0
        %1464 = vmatpush1.msra.mxu0 0.0
        %1465 = vmatprep.subr.mxu0 0.0
        %1466 = vmatpush1.msra.mxu0 0.0
        %1467 = vmatprep.subr.mxu0 0.0
        %1468 = vmatpush1.msra.mxu0 0.0
        %1469 = vmatprep.subr.mxu0 0.0
        %1470 = vmatpush1.msra.mxu0 0.0
        %1471 = vmatprep.subr.mxu0 0.0
        %1472 = vmatpush1.msra.mxu0 0.0
        %1473 = vmatprep.subr.mxu0 0.0
        %1474 = vmatpush1.msra.mxu0 0.0
        %1475 = vmatprep.subr.mxu0 0.0
        %1476 = vmatpush1.msra.mxu0 0.0
        %1477 = vmatprep.subr.mxu0 0.0
        %1478 = vmatpush1.msra.mxu0 0.0
        %1479 = vmatprep.subr.mxu0 0.0
        %1480 = vmatpush1.msra.mxu0 0.0
        %1481 = vmatprep.subr.mxu0 0.0
        %1482 = vmatpush1.msra.mxu0 0.0
        %1483 = vmatprep.subr.mxu0 0.0
        %1484 = vmatpush1.msra.mxu0 0.0
        %1485 = vmatprep.subr.mxu0 0.0
        %1486 = vmatpush1.msra.mxu0 0.0
        %1487 = vmatprep.subr.mxu0 0.0
        %1488 = vmatpush1.msra.mxu0 %v858
        %1489 = vmatprep.subr.mxu0 0.0
        %1490 = vmatpush1.msra.mxu0 %v853
        %1491 = vmatprep.subr.mxu0 0.0
        %1492 = vmatpush2.msra.mxu0 0.0
        %1493 = vmatprep.subr.mxu0 0.0
        %1494 = vmatpush2.msra.mxu0 0.0
        %1495 = vmatprep.subr.mxu0 0.0
        %1496 = vmatpush2.msra.mxu0 0.0
        %1497 = vmatprep.subr.mxu0 0.0
        %1498 = vmatpush2.msra.mxu0 0.0
        %1499 = vmatprep.subr.mxu0 0.0
        %1500 = vmatpush2.msra.mxu0 0.0
        %1501 = vmatprep.subr.mxu0 0.0
        %1502 = vmatpush2.msra.mxu0 0.0
        %1503 = vmatprep.subr.mxu0 0.0
        %1504 = vmatpush2.msra.mxu0 0.0
        %1505 = vmatprep.subr.mxu0 0.0
        %1506 = vmatpush2.msra.mxu0 0.0
        %1507 = vmatprep.subr.mxu0 0.0
        %1508 = vmatpush2.msra.mxu0 0.0
        %1509 = vmatprep.subr.mxu0 0.0
        %1510 = vmatpush2.msra.mxu0 0.0
        %1511 = vmatprep.subr.mxu0 0.0
        %1512 = vmatpush2.msra.mxu0 0.0
        %1513 = vmatprep.subr.mxu0 0.0
        %1514 = vmatpush2.msra.mxu0 0.0
        %1515 = vmatprep.subr.mxu0 0.0
        %1516 = vmatpush2.msra.mxu0 0.0
        %1517 = vmatprep.subr.mxu0 0.0
        %1518 = vmatpush2.msra.mxu0 0.0
        %1519 = vmatprep.subr.mxu0 0.0
        %1520 = vmatpush2.msra.mxu0 0.0
        %1521 = vmatprep.subr.mxu0 0.0
        %1522 = vmatpush2.msra.mxu0 0.0
        %1523 = vmatprep.mubr.f32.mxu0 0.0
        %1524 = vmatmul.mubr.f32.gmra.mxu0 %v781
        %v1525 = vpop.f32.mrf.mxu0
        %v1526 = vadd.f32 0.0, %v1525
        %v1527 = vpop.f32.mrf.mxu0
        %1528 = vmatprep.mubr.f32.mxu0 0.0
        %1529 = vmatmul.mubr.f32.gmra.mxu0 %v784
        %v1530 = vpop.f32.mrf.mxu0
        %v1531 = vadd.f32 0.0, %v1530
        %v1532 = vpop.f32.mrf.mxu0
        %1533 = vdwg.mxu0
        %1534 = vmatprep.subr.mxu0 0.0
        %1535 = vmatpush1.msra.mxu0 0.0
        %1536 = vmatprep.subr.mxu0 0.0
        %1537 = vmatpush1.msra.mxu0 0.0
        %1538 = vmatprep.subr.mxu0 0.0
        %1539 = vmatpush1.msra.mxu0 0.0
        %1540 = vmatprep.subr.mxu0 0.0
        %1541 = vmatpush1.msra.mxu0 0.0
        %1542 = vmatprep.subr.mxu0 0.0
        %1543 = vmatpush1.msra.mxu0 0.0
        %1544 = vmatprep.subr.mxu0 0.0
        %1545 = vmatpush1.msra.mxu0 0.0
        %1546 = vmatprep.subr.mxu0 0.0
        %1547 = vmatpush1.msra.mxu0 0.0
        %1548 = vmatprep.subr.mxu0 0.0
        %1549 = vmatpush1.msra.mxu0 0.0
        %1550 = vmatprep.subr.mxu0 0.0
        %1551 = vmatpush1.msra.mxu0 0.0
        %1552 = vmatprep.subr.mxu0 0.0
        %1553 = vmatpush1.msra.mxu0 0.0
        %1554 = vmatprep.subr.mxu0 0.0
        %1555 = vmatpush1.msra.mxu0 0.0
        %1556 = vmatprep.subr.mxu0 0.0
        %1557 = vmatpush1.msra.mxu0 0.0
        %1558 = vmatprep.subr.mxu0 0.0
        %1559 = vmatpush1.msra.mxu0 0.0
        %1560 = vmatprep.subr.mxu0 0.0
        %1561 = vmatpush1.msra.mxu0 0.0
        %1562 = vmatprep.subr.mxu0 0.0
        %1563 = vmatpush1.msra.mxu0 %v939
        %1564 = vmatprep.subr.mxu0 0.0
        %1565 = vmatpush1.msra.mxu0 %v934
        %1566 = vmatprep.subr.mxu0 0.0
        %1567 = vmatpush2.msra.mxu0 0.0
        %1568 = vmatprep.subr.mxu0 0.0
        %1569 = vmatpush2.msra.mxu0 0.0
        %1570 = vmatprep.subr.mxu0 0.0
        %1571 = vmatpush2.msra.mxu0 0.0
        %1572 = vmatprep.subr.mxu0 0.0
        %1573 = vmatpush2.msra.mxu0 0.0
        %1574 = vmatprep.subr.mxu0 0.0
        %1575 = vmatpush2.msra.mxu0 0.0
        %1576 = vmatprep.subr.mxu0 0.0
        %1577 = vmatpush2.msra.mxu0 0.0
        %1578 = vmatprep.subr.mxu0 0.0
        %1579 = vmatpush2.msra.mxu0 0.0
        %1580 = vmatprep.subr.mxu0 0.0
        %1581 = vmatpush2.msra.mxu0 0.0
        %1582 = vmatprep.subr.mxu0 0.0
        %1583 = vmatpush2.msra.mxu0 0.0
        %1584 = vmatprep.subr.mxu0 0.0
        %1585 = vmatpush2.msra.mxu0 0.0
        %1586 = vmatprep.subr.mxu0 0.0
        %1587 = vmatpush2.msra.mxu0 0.0
        %1588 = vmatprep.subr.mxu0 0.0
        %1589 = vmatpush2.msra.mxu0 0.0
        %1590 = vmatprep.subr.mxu0 0.0
        %1591 = vmatpush2.msra.mxu0 0.0
        %1592 = vmatprep.subr.mxu0 0.0
        %1593 = vmatpush2.msra.mxu0 0.0
        %1594 = vmatprep.subr.mxu0 0.0
        %1595 = vmatpush2.msra.mxu0 0.0
        %1596 = vmatprep.subr.mxu0 0.0
        %1597 = vmatpush2.msra.mxu0 0.0
        %1598 = vmatprep.mubr.f32.mxu0 0.0
        %1599 = vmatmul.mubr.f32.gmra.mxu0 %v862
        %v1600 = vpop.f32.mrf.mxu0
        %v1601 = vadd.f32 0.0, %v1600
        %v1602 = vpop.f32.mrf.mxu0
        %1603 = vmatprep.mubr.f32.mxu0 0.0
        %1604 = vmatmul.mubr.f32.gmra.mxu0 %v865
        %v1605 = vpop.f32.mrf.mxu0
        %v1606 = vadd.f32 0.0, %v1605
        %v1607 = vpop.f32.mrf.mxu0
        %1608 = vdwg.mxu0
        %1609 = vmatprep.subr.mxu0 0.0
        %1610 = vmatpush1.msra.mxu0 0.0
        %1611 = vmatprep.subr.mxu0 0.0
        %1612 = vmatpush1.msra.mxu0 0.0
        %1613 = vmatprep.subr.mxu0 0.0
        %1614 = vmatpush1.msra.mxu0 0.0
        %1615 = vmatprep.subr.mxu0 0.0
        %1616 = vmatpush1.msra.mxu0 0.0
        %1617 = vmatprep.subr.mxu0 0.0
        %1618 = vmatpush1.msra.mxu0 0.0
        %1619 = vmatprep.subr.mxu0 0.0
        %1620 = vmatpush1.msra.mxu0 0.0
        %1621 = vmatprep.subr.mxu0 0.0
        %1622 = vmatpush1.msra.mxu0 0.0
        %1623 = vmatprep.subr.mxu0 0.0
        %1624 = vmatpush1.msra.mxu0 0.0
        %1625 = vmatprep.subr.mxu0 0.0
        %1626 = vmatpush1.msra.mxu0 0.0
        %1627 = vmatprep.subr.mxu0 0.0
        %1628 = vmatpush1.msra.mxu0 0.0
        %1629 = vmatprep.subr.mxu0 0.0
        %1630 = vmatpush1.msra.mxu0 0.0
        %1631 = vmatprep.subr.mxu0 0.0
        %1632 = vmatpush1.msra.mxu0 0.0
        %1633 = vmatprep.subr.mxu0 0.0
        %1634 = vmatpush1.msra.mxu0 0.0
        %1635 = vmatprep.subr.mxu0 0.0
        %1636 = vmatpush1.msra.mxu0 0.0
        %1637 = vmatprep.subr.mxu0 0.0
        %1638 = vmatpush1.msra.mxu0 %v1020
        %1639 = vmatprep.subr.mxu0 0.0
        %1640 = vmatpush1.msra.mxu0 %v1015
        %1641 = vmatprep.subr.mxu0 0.0
        %1642 = vmatpush2.msra.mxu0 0.0
        %1643 = vmatprep.subr.mxu0 0.0
        %1644 = vmatpush2.msra.mxu0 0.0
        %1645 = vmatprep.subr.mxu0 0.0
        %1646 = vmatpush2.msra.mxu0 0.0
        %1647 = vmatprep.subr.mxu0 0.0
        %1648 = vmatpush2.msra.mxu0 0.0
        %1649 = vmatprep.subr.mxu0 0.0
        %1650 = vmatpush2.msra.mxu0 0.0
        %1651 = vmatprep.subr.mxu0 0.0
        %1652 = vmatpush2.msra.mxu0 0.0
        %1653 = vmatprep.subr.mxu0 0.0
        %1654 = vmatpush2.msra.mxu0 0.0
        %1655 = vmatprep.subr.mxu0 0.0
        %1656 = vmatpush2.msra.mxu0 0.0
        %1657 = vmatprep.subr.mxu0 0.0
        %1658 = vmatpush2.msra.mxu0 0.0
        %1659 = vmatprep.subr.mxu0 0.0
        %1660 = vmatpush2.msra.mxu0 0.0
        %1661 = vmatprep.subr.mxu0 0.0
        %1662 = vmatpush2.msra.mxu0 0.0
        %1663 = vmatprep.subr.mxu0 0.0
        %1664 = vmatpush2.msra.mxu0 0.0
        %1665 = vmatprep.subr.mxu0 0.0
        %1666 = vmatpush2.msra.mxu0 0.0
        %1667 = vmatprep.subr.mxu0 0.0
        %1668 = vmatpush2.msra.mxu0 0.0
        %1669 = vmatprep.subr.mxu0 0.0
        %1670 = vmatpush2.msra.mxu0 0.0
        %1671 = vmatprep.subr.mxu0 0.0
        %1672 = vmatpush2.msra.mxu0 0.0
        %1673 = vmatprep.mubr.f32.mxu0 0.0
        %1674 = vmatmul.mubr.f32.gmra.mxu0 %v943
        %v1675 = vpop.f32.mrf.mxu0
        %v1676 = vadd.f32 0.0, %v1675
        %v1677 = vpop.f32.mrf.mxu0
        %1678 = vmatprep.mubr.f32.mxu0 0.0
        %1679 = vmatmul.mubr.f32.gmra.mxu0 %v946
        %v1680 = vpop.f32.mrf.mxu0
        %v1681 = vadd.f32 0.0, %v1680
        %v1682 = vpop.f32.mrf.mxu0
        %1683 = vdwg.mxu0
        %1684 = vmatprep.subr.mxu0 0.0
        %1685 = vmatpush1.msra.mxu0 0.0
        %1686 = vmatprep.subr.mxu0 0.0
        %1687 = vmatpush1.msra.mxu0 0.0
        %1688 = vmatprep.subr.mxu0 0.0
        %1689 = vmatpush1.msra.mxu0 0.0
        %1690 = vmatprep.subr.mxu0 0.0
        %1691 = vmatpush1.msra.mxu0 0.0
        %1692 = vmatprep.subr.mxu0 0.0
        %1693 = vmatpush1.msra.mxu0 0.0
        %1694 = vmatprep.subr.mxu0 0.0
        %1695 = vmatpush1.msra.mxu0 0.0
        %1696 = vmatprep.subr.mxu0 0.0
        %1697 = vmatpush1.msra.mxu0 0.0
        %1698 = vmatprep.subr.mxu0 0.0
        %1699 = vmatpush1.msra.mxu0 0.0
        %1700 = vmatprep.subr.mxu0 0.0
        %1701 = vmatpush1.msra.mxu0 0.0
        %1702 = vmatprep.subr.mxu0 0.0
        %1703 = vmatpush1.msra.mxu0 0.0
        %1704 = vmatprep.subr.mxu0 0.0
        %1705 = vmatpush1.msra.mxu0 0.0
        %1706 = vmatprep.subr.mxu0 0.0
        %1707 = vmatpush1.msra.mxu0 0.0
        %1708 = vmatprep.subr.mxu0 0.0
        %1709 = vmatpush1.msra.mxu0 0.0
        %1710 = vmatprep.subr.mxu0 0.0
        %1711 = vmatpush1.msra.mxu0 0.0
        %1712 = vmatprep.subr.mxu0 0.0
        %1713 = vmatpush1.msra.mxu0 %v1101
        %1714 = vmatprep.subr.mxu0 0.0
        %1715 = vmatpush1.msra.mxu0 %v1096
        %1716 = vmatprep.subr.mxu0 0.0
        %1717 = vmatpush2.msra.mxu0 0.0
        %1718 = vmatprep.subr.mxu0 0.0
        %1719 = vmatpush2.msra.mxu0 0.0
        %1720 = vmatprep.subr.mxu0 0.0
        %1721 = vmatpush2.msra.mxu0 0.0
        %1722 = vmatprep.subr.mxu0 0.0
        %1723 = vmatpush2.msra.mxu0 0.0
        %1724 = vmatprep.subr.mxu0 0.0
        %1725 = vmatpush2.msra.mxu0 0.0
        %1726 = vmatprep.subr.mxu0 0.0
        %1727 = vmatpush2.msra.mxu0 0.0
        %1728 = vmatprep.subr.mxu0 0.0
        %1729 = vmatpush2.msra.mxu0 0.0
        %1730 = vmatprep.subr.mxu0 0.0
        %1731 = vmatpush2.msra.mxu0 0.0
        %1732 = vmatprep.subr.mxu0 0.0
        %1733 = vmatpush2.msra.mxu0 0.0
        %1734 = vmatprep.subr.mxu0 0.0
        %1735 = vmatpush2.msra.mxu0 0.0
        %1736 = vmatprep.subr.mxu0 0.0
        %1737 = vmatpush2.msra.mxu0 0.0
        %1738 = vmatprep.subr.mxu0 0.0
        %1739 = vmatpush2.msra.mxu0 0.0
        %1740 = vmatprep.subr.mxu0 0.0
        %1741 = vmatpush2.msra.mxu0 0.0
        %1742 = vmatprep.subr.mxu0 0.0
        %1743 = vmatpush2.msra.mxu0 0.0
        %1744 = vmatprep.subr.mxu0 0.0
        %1745 = vmatpush2.msra.mxu0 0.0
        %1746 = vmatprep.subr.mxu0 0.0
        %1747 = vmatpush2.msra.mxu0 0.0
        %1748 = vmatprep.mubr.f32.mxu0 0.0
        %1749 = vmatmul.mubr.f32.gmra.mxu0 %v1024
        %v1750 = vpop.f32.mrf.mxu0
        %v1751 = vadd.f32 0.0, %v1750
        %v1752 = vpop.f32.mrf.mxu0
        %1753 = vmatprep.mubr.f32.mxu0 0.0
        %1754 = vmatmul.mubr.f32.gmra.mxu0 %v1027
        %v1755 = vpop.f32.mrf.mxu0
        %v1756 = vadd.f32 0.0, %v1755
        %v1757 = vpop.f32.mrf.mxu0
        %1758 = vdwg.mxu0
        %1759 = vmatprep.subr.mxu0 0.0
        %1760 = vmatpush1.msra.mxu0 0.0
        %1761 = vmatprep.subr.mxu0 0.0
        %1762 = vmatpush1.msra.mxu0 0.0
        %1763 = vmatprep.subr.mxu0 0.0
        %1764 = vmatpush1.msra.mxu0 0.0
        %1765 = vmatprep.subr.mxu0 0.0
        %1766 = vmatpush1.msra.mxu0 0.0
        %1767 = vmatprep.subr.mxu0 0.0
        %1768 = vmatpush1.msra.mxu0 0.0
        %1769 = vmatprep.subr.mxu0 0.0
        %1770 = vmatpush1.msra.mxu0 0.0
        %1771 = vmatprep.subr.mxu0 0.0
        %1772 = vmatpush1.msra.mxu0 0.0
        %1773 = vmatprep.subr.mxu0 0.0
        %1774 = vmatpush1.msra.mxu0 0.0
        %1775 = vmatprep.subr.mxu0 0.0
        %1776 = vmatpush1.msra.mxu0 0.0
        %1777 = vmatprep.subr.mxu0 0.0
        %1778 = vmatpush1.msra.mxu0 0.0
        %1779 = vmatprep.subr.mxu0 0.0
        %1780 = vmatpush1.msra.mxu0 0.0
        %1781 = vmatprep.subr.mxu0 0.0
        %1782 = vmatpush1.msra.mxu0 0.0
        %1783 = vmatprep.subr.mxu0 0.0
        %1784 = vmatpush1.msra.mxu0 0.0
        %1785 = vmatprep.subr.mxu0 0.0
        %1786 = vmatpush1.msra.mxu0 0.0
        %1787 = vmatprep.subr.mxu0 0.0
        %1788 = vmatpush1.msra.mxu0 %v1182
        %1789 = vmatprep.subr.mxu0 0.0
        %1790 = vmatpush1.msra.mxu0 %v1177
        %1791 = vmatprep.subr.mxu0 0.0
        %1792 = vmatpush2.msra.mxu0 0.0
        %1793 = vmatprep.subr.mxu0 0.0
        %1794 = vmatpush2.msra.mxu0 0.0
        %1795 = vmatprep.subr.mxu0 0.0
        %1796 = vmatpush2.msra.mxu0 0.0
        %1797 = vmatprep.subr.mxu0 0.0
        %1798 = vmatpush2.msra.mxu0 0.0
        %1799 = vmatprep.subr.mxu0 0.0
        %1800 = vmatpush2.msra.mxu0 0.0
        %1801 = vmatprep.subr.mxu0 0.0
        %1802 = vmatpush2.msra.mxu0 0.0
        %1803 = vmatprep.subr.mxu0 0.0
        %1804 = vmatpush2.msra.mxu0 0.0
        %1805 = vmatprep.subr.mxu0 0.0
        %1806 = vmatpush2.msra.mxu0 0.0
        %1807 = vmatprep.subr.mxu0 0.0
        %1808 = vmatpush2.msra.mxu0 0.0
        %1809 = vmatprep.subr.mxu0 0.0
        %1810 = vmatpush2.msra.mxu0 0.0
        %1811 = vmatprep.subr.mxu0 0.0
        %1812 = vmatpush2.msra.mxu0 0.0
        %1813 = vmatprep.subr.mxu0 0.0
        %1814 = vmatpush2.msra.mxu0 0.0
        %1815 = vmatprep.subr.mxu0 0.0
        %1816 = vmatpush2.msra.mxu0 0.0
        %1817 = vmatprep.subr.mxu0 0.0
        %1818 = vmatpush2.msra.mxu0 0.0
        %1819 = vmatprep.subr.mxu0 0.0
        %1820 = vmatpush2.msra.mxu0 0.0
        %1821 = vmatprep.subr.mxu0 0.0
        %1822 = vmatpush2.msra.mxu0 0.0
        %1823 = vmatprep.mubr.f32.mxu0 0.0
        %1824 = vmatmul.mubr.f32.gmra.mxu0 %v1105
        %v1825 = vpop.f32.mrf.mxu0
        %v1826 = vadd.f32 0.0, %v1825
        %v1827 = vpop.f32.mrf.mxu0
        %1828 = vmatprep.mubr.f32.mxu0 0.0
        %1829 = vmatmul.mubr.f32.gmra.mxu0 %v1108
        %v1830 = vpop.f32.mrf.mxu0
        %v1831 = vadd.f32 0.0, %v1830
        %v1832 = vpop.f32.mrf.mxu0
        %1833 = vdwg.mxu0
        %1834 = vmatprep.subr.mxu0 0.0
        %1835 = vmatpush1.msra.mxu0 0.0
        %1836 = vmatprep.subr.mxu0 0.0
        %1837 = vmatpush1.msra.mxu0 0.0
        %1838 = vmatprep.subr.mxu0 0.0
        %1839 = vmatpush1.msra.mxu0 0.0
        %1840 = vmatprep.subr.mxu0 0.0
        %1841 = vmatpush1.msra.mxu0 0.0
        %1842 = vmatprep.subr.mxu0 0.0
        %1843 = vmatpush1.msra.mxu0 0.0
        %1844 = vmatprep.subr.mxu0 0.0
        %1845 = vmatpush1.msra.mxu0 0.0
        %1846 = vmatprep.subr.mxu0 0.0
        %1847 = vmatpush1.msra.mxu0 0.0
        %1848 = vmatprep.subr.mxu0 0.0
        %1849 = vmatpush1.msra.mxu0 0.0
        %1850 = vmatprep.subr.mxu0 0.0
        %1851 = vmatpush1.msra.mxu0 0.0
        %1852 = vmatprep.subr.mxu0 0.0
        %1853 = vmatpush1.msra.mxu0 0.0
        %1854 = vmatprep.subr.mxu0 0.0
        %1855 = vmatpush1.msra.mxu0 0.0
        %1856 = vmatprep.subr.mxu0 0.0
        %1857 = vmatpush1.msra.mxu0 0.0
        %1858 = vmatprep.subr.mxu0 0.0
        %1859 = vmatpush1.msra.mxu0 0.0
        %1860 = vmatprep.subr.mxu0 0.0
        %1861 = vmatpush1.msra.mxu0 0.0
        %1862 = vmatprep.subr.mxu0 0.0
        %1863 = vmatpush1.msra.mxu0 %v1263
        %1864 = vmatprep.subr.mxu0 0.0
        %1865 = vmatpush1.msra.mxu0 %v1258
        %1866 = vmatprep.subr.mxu0 0.0
        %1867 = vmatpush2.msra.mxu0 0.0
        %1868 = vmatprep.subr.mxu0 0.0
        %1869 = vmatpush2.msra.mxu0 0.0
        %1870 = vmatprep.subr.mxu0 0.0
        %1871 = vmatpush2.msra.mxu0 0.0
        %1872 = vmatprep.subr.mxu0 0.0
        %1873 = vmatpush2.msra.mxu0 0.0
        %1874 = vmatprep.subr.mxu0 0.0
        %1875 = vmatpush2.msra.mxu0 0.0
        %1876 = vmatprep.subr.mxu0 0.0
        %1877 = vmatpush2.msra.mxu0 0.0
        %1878 = vmatprep.subr.mxu0 0.0
        %1879 = vmatpush2.msra.mxu0 0.0
        %1880 = vmatprep.subr.mxu0 0.0
        %1881 = vmatpush2.msra.mxu0 0.0
        %1882 = vmatprep.subr.mxu0 0.0
        %1883 = vmatpush2.msra.mxu0 0.0
        %1884 = vmatprep.subr.mxu0 0.0
        %1885 = vmatpush2.msra.mxu0 0.0
        %1886 = vmatprep.subr.mxu0 0.0
        %1887 = vmatpush2.msra.mxu0 0.0
        %1888 = vmatprep.subr.mxu0 0.0
        %1889 = vmatpush2.msra.mxu0 0.0
        %1890 = vmatprep.subr.mxu0 0.0
        %1891 = vmatpush2.msra.mxu0 0.0
        %1892 = vmatprep.subr.mxu0 0.0
        %1893 = vmatpush2.msra.mxu0 0.0
        %1894 = vmatprep.subr.mxu0 0.0
        %1895 = vmatpush2.msra.mxu0 0.0
        %1896 = vmatprep.subr.mxu0 0.0
        %1897 = vmatpush2.msra.mxu0 0.0
        %1898 = vmatprep.mubr.f32.mxu0 0.0
        %1899 = vmatmul.mubr.f32.gmra.mxu0 %v1186
        %v1900 = vpop.f32.mrf.mxu0
        %v1901 = vadd.f32 0.0, %v1900
        %v1902 = vpop.f32.mrf.mxu0
        %1903 = vmatprep.mubr.f32.mxu0 0.0
        %1904 = vmatmul.mubr.f32.gmra.mxu0 %v1189
        %v1905 = vpop.f32.mrf.mxu0
        %v1906 = vadd.f32 0.0, %v1905
        %v1907 = vpop.f32.mrf.mxu0
        %1908 = vdwg.mxu0
        %1909 = vmatprep.subr.mxu0 0.0
        %1910 = vmatpush1.msra.mxu0 0.0
        %1911 = vmatprep.subr.mxu0 0.0
        %1912 = vmatpush1.msra.mxu0 0.0
        %1913 = vmatprep.subr.mxu0 0.0
        %1914 = vmatpush1.msra.mxu0 0.0
        %1915 = vmatprep.subr.mxu0 0.0
        %1916 = vmatpush1.msra.mxu0 0.0
        %1917 = vmatprep.subr.mxu0 0.0
        %1918 = vmatpush1.msra.mxu0 0.0
        %1919 = vmatprep.subr.mxu0 0.0
        %1920 = vmatpush1.msra.mxu0 0.0
        %1921 = vmatprep.subr.mxu0 0.0
        %1922 = vmatpush1.msra.mxu0 0.0
        %1923 = vmatprep.subr.mxu0 0.0
        %1924 = vmatpush1.msra.mxu0 0.0
        %1925 = vmatprep.subr.mxu0 0.0
        %1926 = vmatpush1.msra.mxu0 0.0
        %1927 = vmatprep.subr.mxu0 0.0
        %1928 = vmatpush1.msra.mxu0 0.0
        %1929 = vmatprep.subr.mxu0 0.0
        %1930 = vmatpush1.msra.mxu0 0.0
        %1931 = vmatprep.subr.mxu0 0.0
        %1932 = vmatpush1.msra.mxu0 0.0
        %1933 = vmatprep.subr.mxu0 0.0
        %1934 = vmatpush1.msra.mxu0 0.0
        %1935 = vmatprep.subr.mxu0 0.0
        %1936 = vmatpush1.msra.mxu0 0.0
        %1937 = vmatprep.subr.mxu0 0.0
        %1938 = vmatpush1.msra.mxu0 %v1344
        %1939 = vmatprep.subr.mxu0 0.0
        %1940 = vmatpush1.msra.mxu0 %v1339
        %1941 = vmatprep.subr.mxu0 0.0
        %1942 = vmatpush2.msra.mxu0 0.0
        %1943 = vmatprep.subr.mxu0 0.0
        %1944 = vmatpush2.msra.mxu0 0.0
        %1945 = vmatprep.subr.mxu0 0.0
        %1946 = vmatpush2.msra.mxu0 0.0
        %1947 = vmatprep.subr.mxu0 0.0
        %1948 = vmatpush2.msra.mxu0 0.0
        %1949 = vmatprep.subr.mxu0 0.0
        %1950 = vmatpush2.msra.mxu0 0.0
        %1951 = vmatprep.subr.mxu0 0.0
        %1952 = vmatpush2.msra.mxu0 0.0
        %1953 = vmatprep.subr.mxu0 0.0
        %1954 = vmatpush2.msra.mxu0 0.0
        %1955 = vmatprep.subr.mxu0 0.0
        %1956 = vmatpush2.msra.mxu0 0.0
        %1957 = vmatprep.subr.mxu0 0.0
        %1958 = vmatpush2.msra.mxu0 0.0
        %1959 = vmatprep.subr.mxu0 0.0
        %1960 = vmatpush2.msra.mxu0 0.0
        %1961 = vmatprep.subr.mxu0 0.0
        %1962 = vmatpush2.msra.mxu0 0.0
        %1963 = vmatprep.subr.mxu0 0.0
        %1964 = vmatpush2.msra.mxu0 0.0
        %1965 = vmatprep.subr.mxu0 0.0
        %1966 = vmatpush2.msra.mxu0 0.0
        %1967 = vmatprep.subr.mxu0 0.0
        %1968 = vmatpush2.msra.mxu0 0.0
        %1969 = vmatprep.subr.mxu0 0.0
        %1970 = vmatpush2.msra.mxu0 0.0
        %1971 = vmatprep.subr.mxu0 0.0
        %1972 = vmatpush2.msra.mxu0 0.0
        %1973 = vmatprep.mubr.f32.mxu0 0.0
        %1974 = vmatmul.mubr.f32.gmra.mxu0 %v1267
        %v1975 = vpop.f32.mrf.mxu0
        %v1976 = vadd.f32 0.0, %v1975
        %v1977 = vpop.f32.mrf.mxu0
        %1978 = vmatprep.mubr.f32.mxu0 0.0
        %1979 = vmatmul.mubr.f32.gmra.mxu0 %v1270
        %v1980 = vpop.f32.mrf.mxu0
        %v1981 = vadd.f32 0.0, %v1980
        %v1982 = vpop.f32.mrf.mxu0
        %1983 = vdwg.mxu0
        %v1984 = vld [vmem:[%s3 + $0x2] sm:$0x1]
        %v1985 = vlaneseq
        %v1986 = vshrl.u32 %v1985, 7
        %v1987 = vsub.s32 0, %v1986
        %v1988 = vrot.slane %v1984, %v1987
        %v1989 = vmul.f32 %v1451, %v1988
        %v1990 = vmul.f32 %v1456, %v1988
        %v1991 = vmul.f32 %v1526, %v1988
        %v1992 = vmul.f32 %v1531, %v1988
        %v1993 = vmul.f32 %v1601, %v1988
        %v1994 = vmul.f32 %v1606, %v1988
        %v1995 = vmul.f32 %v1676, %v1988
        %v1996 = vmul.f32 %v1681, %v1988
        %v1997 = vmul.f32 %v1751, %v1988
        %v1998 = vmul.f32 %v1756, %v1988
        %v1999 = vmul.f32 %v1826, %v1988
        %v2000 = vmul.f32 %v1831, %v1988
        %v2001 = vmul.f32 %v1901, %v1988
        %v2002 = vmul.f32 %v1906, %v1988
        %v2003 = vmul.f32 %v1976, %v1988
        %v2004 = vmul.f32 %v1981, %v1988
        %v2005 = vadd.f32 %v1368, %v1989
        %v2006 = vadd.f32 %v1369, %v1990
        %v2007 = vadd.f32 %v1370, %v1991
        %v2008 = vadd.f32 %v1371, %v1992
        %v2009 = vadd.f32 %v1372, %v1993
        %v2010 = vadd.f32 %v1373, %v1994
        %v2011 = vadd.f32 %v1374, %v1995
        %v2012 = vadd.f32 %v1375, %v1996
        %v2013 = vadd.f32 %v1376, %v1997
        %v2014 = vadd.f32 %v1377, %v1998
        %v2015 = vadd.f32 %v1378, %v1999
        %v2016 = vadd.f32 %v1379, %v2000
        %v2017 = vadd.f32 %v1380, %v2001
        %v2018 = vadd.f32 %v1381, %v2002
        %v2019 = vadd.f32 %v1382, %v2003
        %v2020 = vadd.f32 %v1383, %v2004
        %vm2021 = vcmask 261120
        %v2022 = vsel %vm2021, %v2005, 0.0
        %2023 = vadd.xlane.f32.xlu0 %v2022
        %v2024 = vpop.xlane.xlu0 %2023
        %v2025 = vsel %vm2021, %v2006, 0.0
        %2026 = vadd.xlane.f32.xlu0 %v2025
        %v2027 = vpop.xlane.xlu0 %2026
        %v2028 = vsel %vm2021, %v2007, 0.0
        %2029 = vadd.xlane.f32.xlu0 %v2028
        %v2030 = vpop.xlane.xlu0 %2029
        %v2031 = vsel %vm2021, %v2008, 0.0
        %2032 = vadd.xlane.f32.xlu0 %v2031
        %v2033 = vpop.xlane.xlu0 %2032
        %v2034 = vsel %vm2021, %v2009, 0.0
        %2035 = vadd.xlane.f32.xlu0 %v2034
        %v2036 = vpop.xlane.xlu0 %2035
        %v2037 = vsel %vm2021, %v2010, 0.0
        %2038 = vadd.xlane.f32.xlu0 %v2037
        %v2039 = vpop.xlane.xlu0 %2038
        %v2040 = vsel %vm2021, %v2011, 0.0
        %2041 = vadd.xlane.f32.xlu0 %v2040
        %v2042 = vpop.xlane.xlu0 %2041
        %v2043 = vsel %vm2021, %v2012, 0.0
        %2044 = vadd.xlane.f32.xlu0 %v2043
        %v2045 = vpop.xlane.xlu0 %2044
        %v2046 = vsel %vm2021, %v2013, 0.0
        %2047 = vadd.xlane.f32.xlu0 %v2046
        %v2048 = vpop.xlane.xlu0 %2047
        %v2049 = vsel %vm2021, %v2014, 0.0
        %2050 = vadd.xlane.f32.xlu0 %v2049
        %v2051 = vpop.xlane.xlu0 %2050
        %v2052 = vsel %vm2021, %v2015, 0.0
        %2053 = vadd.xlane.f32.xlu0 %v2052
        %v2054 = vpop.xlane.xlu0 %2053
        %v2055 = vsel %vm2021, %v2016, 0.0
        %2056 = vadd.xlane.f32.xlu0 %v2055
        %v2057 = vpop.xlane.xlu0 %2056
        %v2058 = vsel %vm2021, %v2017, 0.0
        %2059 = vadd.xlane.f32.xlu0 %v2058
        %v2060 = vpop.xlane.xlu0 %2059
        %v2061 = vsel %vm2021, %v2018, 0.0
        %2062 = vadd.xlane.f32.xlu0 %v2061
        %v2063 = vpop.xlane.xlu0 %2062
        %v2064 = vsel %vm2021, %v2019, 0.0
        %2065 = vadd.xlane.f32.xlu0 %v2064
        %v2066 = vpop.xlane.xlu0 %2065
        %v2067 = vsel %vm2021, %v2020, 0.0
        %2068 = vadd.xlane.f32.xlu0 %v2067
        %v2069 = vpop.xlane.xlu0 %2068
        %s2070 = sld [smem:[#allocation2]]
        %v2071 = vstv %s2070
        %v2072 = vadd.f32 %v2024, %v2071
        %v2073 = vadd.f32 %v2027, %v2071
        %v2074 = vadd.f32 %v2030, %v2071
        %v2075 = vadd.f32 %v2033, %v2071
        %v2076 = vadd.f32 %v2036, %v2071
        %v2077 = vadd.f32 %v2039, %v2071
        %v2078 = vadd.f32 %v2042, %v2071
        %v2079 = vadd.f32 %v2045, %v2071
        %v2080 = vadd.f32 %v2048, %v2071
        %v2081 = vadd.f32 %v2051, %v2071
        %v2082 = vadd.f32 %v2054, %v2071
        %v2083 = vadd.f32 %v2057, %v2071
        %v2084 = vadd.f32 %v2060, %v2071
        %v2085 = vadd.f32 %v2063, %v2071
        %v2086 = vadd.f32 %v2066, %v2071
        %v2087 = vadd.f32 %v2069, %v2071
        %v2088 = vand.u32 2147483647, %v2072
        %v2089 = vand.u32 2147483647, %v2073
        %v2090 = vand.u32 2147483647, %v2074
        %v2091 = vand.u32 2147483647, %v2075
        %v2092 = vand.u32 2147483647, %v2076
        %v2093 = vand.u32 2147483647, %v2077
        %v2094 = vand.u32 2147483647, %v2078
        %v2095 = vand.u32 2147483647, %v2079
        %v2096 = vand.u32 2147483647, %v2080
        %v2097 = vand.u32 2147483647, %v2081
        %v2098 = vand.u32 2147483647, %v2082
        %v2099 = vand.u32 2147483647, %v2083
        %v2100 = vand.u32 2147483647, %v2084
        %v2101 = vand.u32 2147483647, %v2085
        %v2102 = vand.u32 2147483647, %v2086
        %v2103 = vand.u32 2147483647, %v2087
        %v2120 = vlaneseq
        %v2121 = vshrl.u32 %v2120, 7
        %v2122 = vsub.s32 %v384, %v2121
        %v2123 = vrot.slane %v2088, %v2122
        %v2124 = vlaneseq
        %v2125 = vshrl.u32 %v2124, 7
        %v2126 = vsub.s32 %v389, %v2125
        %v2127 = vrot.slane %v2089, %v2126
        %v2128 = vsel %vm394, %v2127, %v2123
        %v2129 = vlaneseq
        %v2130 = vshrl.u32 %v2129, 7
        %v2131 = vsub.s32 %v384, %v2130
        %v2132 = vrot.slane %v2090, %v2131
        %v2133 = vlaneseq
        %v2134 = vshrl.u32 %v2133, 7
        %v2135 = vsub.s32 %v389, %v2134
        %v2136 = vrot.slane %v2091, %v2135
        %v2137 = vsel %vm394, %v2136, %v2132
        %v2138 = vlaneseq
        %v2139 = vshrl.u32 %v2138, 7
        %v2140 = vsub.s32 %v384, %v2139
        %v2141 = vrot.slane %v2092, %v2140
        %v2142 = vlaneseq
        %v2143 = vshrl.u32 %v2142, 7
        %v2144 = vsub.s32 %v389, %v2143
        %v2145 = vrot.slane %v2093, %v2144
        %v2146 = vsel %vm394, %v2145, %v2141
        %v2147 = vlaneseq
        %v2148 = vshrl.u32 %v2147, 7
        %v2149 = vsub.s32 %v384, %v2148
        %v2150 = vrot.slane %v2094, %v2149
        %v2151 = vlaneseq
        %v2152 = vshrl.u32 %v2151, 7
        %v2153 = vsub.s32 %v389, %v2152
        %v2154 = vrot.slane %v2095, %v2153
        %v2155 = vsel %vm394, %v2154, %v2150
        %v2156 = vlaneseq
        %v2157 = vshrl.u32 %v2156, 7
        %v2158 = vsub.s32 %v384, %v2157
        %v2159 = vrot.slane %v2096, %v2158
        %v2160 = vlaneseq
        %v2161 = vshrl.u32 %v2160, 7
        %v2162 = vsub.s32 %v389, %v2161
        %v2163 = vrot.slane %v2097, %v2162
        %v2164 = vsel %vm394, %v2163, %v2159
        %v2165 = vlaneseq
        %v2166 = vshrl.u32 %v2165, 7
        %v2167 = vsub.s32 %v384, %v2166
        %v2168 = vrot.slane %v2098, %v2167
        %v2169 = vlaneseq
        %v2170 = vshrl.u32 %v2169, 7
        %v2171 = vsub.s32 %v389, %v2170
        %v2172 = vrot.slane %v2099, %v2171
        %v2173 = vsel %vm394, %v2172, %v2168
        %v2174 = vlaneseq
        %v2175 = vshrl.u32 %v2174, 7
        %v2176 = vsub.s32 %v384, %v2175
        %v2177 = vrot.slane %v2100, %v2176
        %v2178 = vlaneseq
        %v2179 = vshrl.u32 %v2178, 7
        %v2180 = vsub.s32 %v389, %v2179
        %v2181 = vrot.slane %v2101, %v2180
        %v2182 = vsel %vm394, %v2181, %v2177
        %v2183 = vlaneseq
        %v2184 = vshrl.u32 %v2183, 7
        %v2185 = vsub.s32 %v384, %v2184
        %v2186 = vrot.slane %v2102, %v2185
        %v2187 = vlaneseq
        %v2188 = vshrl.u32 %v2187, 7
        %v2189 = vsub.s32 %v389, %v2188
        %v2190 = vrot.slane %v2103, %v2189
        %v2191 = vsel %vm394, %v2190, %v2186
        %v2192 = vsel %vm459, %v2137, %v2128
        %v2193 = vsel %vm460, %v2146, %v2192
        %v2194 = vsel %vm462, %v2155, %v2193
        %v2195 = vsel %vm464, %v2164, %v2194
        %v2196 = vsel %vm466, %v2173, %v2195
        %v2197 = vsel %vm468, %v2182, %v2196
        %v2198 = vsel %vm470, %v2191, %v2197
        %2200 = vst.msk [vmem:[%s257] sm:$0xff] %vm281, %v2198
        %s2201 = sand.u32 %s142, 1
        %s2202 = scalar_lea.sflag [#allocation5], %s2201
        %s2203 = sand.u32 %s142, 1
        %s2204 = smul.addr %s2203, 8
        %s2205 = scalar_lea.vmem [#allocation8], %s2204
        // Predicated region
        $region49: #{tpu_custom_call.1} parent=39 // pred_check
          %p2206 = pneg %p152
        $region50: #{tpu_custom_call.1} parent=39 // pred_check_branch
          %2208 = sbr.rel (%p2206) target = $region52
        $region51: #{tpu_custom_call.1} parent=39 // pred_region
          %s2210 = ssub.s32 128, 128
          %2211 = vsyncadd %s2202, %s2210
          %s2212 = smul.addr %s24, 128
          %s2213 = scalar_lea.hbm %s5, %s2212
          %s2215 = sshll.u32 %s2205, 4
          %s2216 = int_to_ptr.vmem [resolvable:$true] %s2215
          %2218 = dma.vmem_to_hbm [thread:$0]  %s2216, 128, %s2213, %s2202
        $region52: #{tpu_custom_call.1} parent=39 // pred_fallthru
          _
      $region40: #{tpu_custom_call.1} parent=5 // pred_fallthru
        _
      %p2219 = scmp.le.s32.totalorder 2, %s19
      // Predicated region
      $region53: #{tpu_custom_call.1} parent=5 // pred_check
        %p2220 = pneg %p2219
      $region54: #{tpu_custom_call.1} parent=5 // pred_check_branch
        %2222 = sbr.rel (%p2220) target = $region56
      $region55: #{tpu_custom_call.1} parent=5 // pred_region
        %s2223 = ssub.s32 %s19, 2
        // Predicated region
        $region57: #{tpu_custom_call.1} parent=55 // pred_check
          %p2224 = pneg %p158
        $region58: #{tpu_custom_call.1} parent=55 // pred_check_branch
          %2226 = sbr.rel (%p2224) target = $region60
        $region59: #{tpu_custom_call.1} parent=55 // pred_region
          %s2227 = sand.u32 %s143, 1
          %s2228 = scalar_lea.sflag [#allocation5], %s2227
          %s2229 = sand.u32 %s143, 1
          %s2230 = smul.addr %s2229, 8
          %s2231 = scalar_lea.vmem [#allocation8], %s2230
          %2232 = dma.done %s2228, 128
        $region60: #{tpu_custom_call.1} parent=55 // pred_fallthru
          _
      $region56: #{tpu_custom_call.1} parent=5 // pred_fallthru
        _
    $region6: #{tpu_custom_call.1} parent=1 // loop_footer
      %s23 = sadd.s32 1, %s19
    $region7: #{tpu_custom_call.1} parent=1 // loop_footer_branch
      %18 = sbr.rel target = $region3
    $region8: #{tpu_custom_call.1} parent=1 // loop_exit
      _
    %2233 = vsyncpa [#allocation4], 1
    %s2234 = scalar_lea.sflag [#allocation4], 1
    %2235 = vsyncpa %s2234, 1
    %2236 = vsyncpa [#allocation7], 1
    %2237 = vsyncpa [#allocation5], 1
    %s2238 = scalar_lea.sflag [#allocation5], 1
    %2239 = vsyncpa %s2238, 1

</llo_original>
